<compile_context>
chip_gen: v7x
topology: tpu7x:2x2x1
jax: 0.10.0
libtpu: 0.0.40
codegen_flags: <defaults>
</compile_context>

<pallas_src>
import functools

import jax
import jax.numpy as jnp
from jax.experimental import pallas as pl
from jax.experimental.pallas import tpu as pltpu

_LANE = 128
_SUB = 8
_NUM_ACC = 15   # 3 + 3 accumulators for the two full-res pairs, 1 shared tsum,
                # 4 each for the streamed pool-2 and pool-4 pairs.


# ---------------------------------------------------------------------------
# wrapper-side helpers
# ---------------------------------------------------------------------------
def _round_up(x, m):
    return ((x + m - 1) // m) * m


def _cdiv(a, b):
    return -(-a // b)


def _max_pool2d(x, k):
    """F.max_pool2d(x, kernel_size=k, stride=k) for NCHW with H, W % k == 0."""
    b, c, h, w = x.shape
    return x.reshape(b, c, h // k, k, w // k, k).max(axis=(3, 5))


def _pad_axis(x, axis, new_size):
    pad = new_size - x.shape[axis]
    if pad == 0:
        return x
    widths = [(0, 0)] * x.ndim
    widths[axis] = (0, pad)
    return jnp.pad(x, widths)       # zero padding is value-safe for BCE & Dice


def _prep_stream(x, b, rows_pad):
    """(B, ...) -> (B, rows_pad, 128) lane-dense, zero padded."""
    flat = x.reshape(b, -1)
    flat = _pad_axis(flat, 1, rows_pad * _LANE)
    return flat.reshape(b, rows_pad, _LANE)


def _prep_resident(x, b):
    """(B, ...) -> (B, rows, 128) lane-dense (rows = ceil(n/128))."""
    flat = x.reshape(b, -1)
    rows = max(1, _round_up(flat.shape[1], _LANE) // _LANE)
    flat = _pad_axis(flat, 1, rows * _LANE)
    return flat.reshape(b, rows, _LANE)


def _vmem_limit_bytes():
    """Generation-aware scoped-VMEM budget."""
    cap = None
    try:
        info = pltpu.get_tpu_info()
        cap = getattr(info, "vmem_capacity_bytes", None)
    except Exception:
        cap = None
    if cap is None:
        cap = 64 * 1024 * 1024            # assume v7x-class if unknown
    if cap >= 128 * 1024 * 1024:          # v5e / v6e: 128 MiB physical
        return 96 * 1024 * 1024
    return 40 * 1024 * 1024               # v7x: 64 MiB physical


# ---------------------------------------------------------------------------
# kernel-side math helpers
# ---------------------------------------------------------------------------
def _bce_elems(p, t):
    """BCE elements with PyTorch's log clamp at -100 (padding-safe form)."""
    log_p = jnp.maximum(jnp.log(p), -100.0)
    log_1mp = jnp.maximum(jnp.log(1.0 - p), -100.0)
    # -(t*log_p + (1-t)*log_1mp) == -(t*(log_p - log_1mp) + log_1mp)
    return -(t * (log_p - log_1mp) + log_1mp)


def _chunk_sum(x):
    """(B, TM, 128) -> (B, 8, 128) partial sums; TM % 8 == 0.

    Reshape splits the sublane axis at vreg boundaries, so the reduction over
    axis=1 is plain VALU vreg adds (no XLU work in the hot loop).
    """
    b, tm, lane = x.shape
    return jnp.sum(x.reshape(b, tm // _SUB, _SUB, lane), axis=1)


def _collapse(acc_ref):
    """(B, 8, 128) accumulator -> (B, 1) per-sample scalars (finalize only)."""
    s = jnp.sum(acc_ref[...], axis=-1)              # (B, 8)   cross-lane
    return jnp.sum(s, axis=-1, keepdims=True)       # (B, 1)   cross-sublane


def _persample_sum(x):
    """Sum over every axis except 0; returns (B, 1)."""
    while x.ndim > 2:
        x = jnp.sum(x, axis=-1)
    return jnp.sum(x, axis=-1, keepdims=True)


# ---------------------------------------------------------------------------
# Pallas kernel
# ---------------------------------------------------------------------------
def _edge_bcedice_kernel(
    w_ref,                                   # SMEM (2,): [wb, wd]
    out_ref, gt1_ref, tgt_ref,               # (B, TM,   128) streamed chunks
    gt2_ref, t2_ref,                         # (B, TM2,  128) streamed (pool-2)
    gt3_ref, t3_ref,                         # (B, TM3,  128) streamed (pool-4)
    gt4_ref, t4_ref, gt5_ref, t5_ref,        # tiny full-resident blocks
    loss_ref,                                # SMEM (1,) scalar output
    inter0, psum0, bce0,                     # accumulators: (out, target)
    inter1, psum1, bce1,                     # accumulators: (gt1, target)
    tsum_f,                                  # shared sum(target)
    inter2, psum2, bce2, tsum2,              # accumulators: (gt2, pool-2 tgt)
    inter3, psum3, bce3, tsum3,              # accumulators: (gt3, pool-4 tgt)
    *, batch, n_full, n2, n3, resident_ns):
    step = pl.program_id(0)
    last = pl.num_programs(0) - 1
    accs = (inter0, psum0, bce0, inter1, psum1, bce1, tsum_f,
            inter2, psum2, bce2, tsum2, inter3, psum3, bce3, tsum3)

    @pl.when(step == 0)
    def _init():
        for r in accs:
            r[...] = jnp.zeros_like(r)

    def acc_pred(p_ref, t, inter, psum, bce):
        p = p_ref[...].astype(jnp.float32)
        inter[...] += _chunk_sum(p * t)
        psum[...] += _chunk_sum(p)
        bce[...] += _chunk_sum(_bce_elems(p, t))

    # ---- full-resolution pairs (shared target) ----------------------------
    t_full = tgt_ref[...].astype(jnp.float32)
    tsum_f[...] += _chunk_sum(t_full)
    acc_pred(out_ref, t_full, inter0, psum0, bce0)
    acc_pred(gt1_ref, t_full, inter1, psum1, bce1)

    # ---- streamed pool-2 pair ----------------------------------------------
    t2 = t2_ref[...].astype(jnp.float32)
    tsum2[...] += _chunk_sum(t2)
    acc_pred(gt2_ref, t2, inter2, psum2, bce2)

    # ---- streamed pool-4 pair ----------------------------------------------
    t3 = t3_ref[...].astype(jnp.float32)
    tsum3[...] += _chunk_sum(t3)
    acc_pred(gt3_ref, t3, inter3, psum3, bce3)

    # ---- finalize on the last grid step ------------------------------------
    @pl.when(step == last)
    def _finalize():
        wb = w_ref[0]
        wd = w_ref[1]
        inv_b = 1.0 / batch

        def pair_loss(bce_b, inter_b, psum_b, tsum_b, n):
            bce = jnp.sum(bce_b) * (1.0 / (batch * n))
            dice_score = (2.0 * inter_b + 1.0) / (psum_b + tsum_b + 1.0)
            dice = 1.0 - jnp.sum(dice_score) * inv_b
            return wd * dice + wb * bce

        tsum_full = _collapse(tsum_f)
        total = pair_loss(_collapse(bce0), _collapse(inter0),
                          _collapse(psum0), tsum_full, n_full)
        total += 0.5 * pair_loss(_collapse(bce1), _collapse(inter1),
                                 _collapse(psum1), tsum_full, n_full)
        total += 0.4 * pair_loss(_collapse(bce2), _collapse(inter2),
                                 _collapse(psum2), _collapse(tsum2), n2)
        total += 0.3 * pair_loss(_collapse(bce3), _collapse(inter3),
                                 _collapse(psum3), _collapse(tsum3), n3)

        resident = ((gt4_ref, t4_ref, 0.2, resident_ns[0]),
                    (gt5_ref, t5_ref, 0.1, resident_ns[1]))
        for p_ref, t_ref, w, n in resident:
            p = p_ref[...].astype(jnp.float32)
            tt = t_ref[...].astype(jnp.float32)
            total += w * pair_loss(_persample_sum(_bce_elems(p, tt)),
                                   _persample_sum(p * tt),
                                   _persample_sum(p),
                                   _persample_sum(tt), n)

        loss_ref[0] = total


# ---------------------------------------------------------------------------
# wrapper
# ---------------------------------------------------------------------------
def edge_bce_dice_loss(gt_pre, out, target, wb=1.0, wd=1.0):
    """Pallas implementation of edge_BceDiceLoss.forward (NCHW inputs)."""
    b = out.shape[0]
    n_full = int(out.size) // b
    gt5, gt4, gt3, gt2, gt1 = gt_pre

    # Hierarchical pool-by-2 chain reproduces pools 2/4/8/16 while reading
    # the full-resolution target only once.
    t2 = _max_pool2d(target, 2)
    t3 = _max_pool2d(t2, 2)
    t4 = _max_pool2d(t3, 2)
    t5 = _max_pool2d(t4, 2)

    # Binary segmentation masks are exactly representable in bf16 -> halve
    # target HBM traffic.  TODO(synk): keep f32 if soft targets are used.
    tb = jnp.bfloat16
    tgt_b = target.astype(tb)
    t2_b = t2.astype(tb)
    t3_b = t3.astype(tb)
    t4_b = t4.astype(tb)
    t5_b = t5.astype(tb)

    n2 = int(gt2.size) // b
    n3 = int(gt3.size) // b
    n4 = int(gt4.size) // b
    n5 = int(gt5.size) // b

    # ---- tiny resident pooled pairs (pool-8 / pool-16) ---------------------
    gt4_r = _prep_resident(gt4, b)
    t4_r = _prep_resident(t4_b, b)
    gt5_r = _prep_resident(gt5, b)
    t5_r = _prep_resident(t5_b, b)

    pred_bytes = jnp.dtype(out.dtype).itemsize
    tgt_bytes = jnp.dtype(tb).itemsize
    resident_bytes = sum(int(x.size) * jnp.dtype(x.dtype).itemsize
                         for x in (gt4_r, t4_r, gt5_r, t5_r))
    acc_bytes = _NUM_ACC * b * _SUB * _LANE * 4
    budget = _vmem_limit_bytes()

    # ---- VMEM-budget-aware tile for the streamed chunk axis ----------------
    m_full = _cdiv(n_full, _LANE)              # full-res rows of 128 lanes
    # Bytes per full-res row per pipeline step: 2 preds + bf16 target at full
    # res, plus the pool-2 / pool-4 streams at ~1/4 and ~1/16 density
    # (inflated for the 16-row tile floors), double-buffered.
    per_row = 2.0 * b * _LANE * (2 * pred_bytes + tgt_bytes
                                 + 0.30 * (pred_bytes + tgt_bytes)
                                 + 0.12 * (pred_bytes + tgt_bytes))
    avail = budget - resident_bytes - acc_bytes - (4 << 20)
    max_tile = int(avail // per_row) if avail > 0 else 16
    max_tile = max(16, min(max_tile, 1024))
    max_tile -= max_tile % 16
    max_tile = max(16, max_tile)
    tile_m = min(max_tile, _round_up(m_full, 16))     # multiple of 16 (bf16)
    grid_n = _cdiv(m_full, tile_m)
    m_pad = grid_n * tile_m

    # Pooled streamed tiles share the same grid; also 16-row aligned.
    m2 = _cdiv(n2, _LANE)
    tile_m2 = _round_up(_cdiv(m2, grid_n), 16)
    m2_pad = grid_n * tile_m2
    m3 = _cdiv(n3, _LANE)
    tile_m3 = _round_up(_cdiv(m3, grid_n), 16)
    m3_pad = grid_n * tile_m3

    out_s = _prep_stream(out, b, m_pad)
    gt1_s = _prep_stream(gt1, b, m_pad)
    tgt_s = _prep_stream(tgt_b, b, m_pad)      # single copy, shared by 2 pairs
    gt2_s = _prep_stream(gt2, b, m2_pad)
    t2_s = _prep_stream(t2_b, b, m2_pad)
    gt3_s = _prep_stream(gt3, b, m3_pad)
    t3_s = _prep_stream(t3_b, b, m3_pad)

    def stream_spec(tile):
        return pl.BlockSpec((b, tile, _LANE), lambda i: (0, i, 0))

    def const_spec(x):
        return pl.BlockSpec(x.shape, lambda i: (0, 0, 0))

    wparams = jnp.array([wb, wd], dtype=jnp.float32)

    kernel = functools.partial(
        _edge_bcedice_kernel, batch=b, n_full=n_full, n2=n2, n3=n3,
        resident_ns=(n4, n5))

    grid_spec = pltpu.PrefetchScalarGridSpec(
        num_scalar_prefetch=0,
        grid=(grid_n,),
        in_specs=[pl.BlockSpec(memory_space=pltpu.MemorySpace.SMEM),
                  stream_spec(tile_m), stream_spec(tile_m), stream_spec(tile_m),
                  stream_spec(tile_m2), stream_spec(tile_m2),
                  stream_spec(tile_m3), stream_spec(tile_m3),
                  const_spec(gt4_r), const_spec(t4_r),
                  const_spec(gt5_r), const_spec(t5_r)],
        out_specs=pl.BlockSpec(memory_space=pltpu.MemorySpace.SMEM),
        scratch_shapes=[pltpu.VMEM((b, _SUB, _LANE), jnp.float32)] * _NUM_ACC,
    )

    result = pl.pallas_call(
        kernel,
        out_shape=jax.ShapeDtypeStruct((1,), jnp.float32),
        grid_spec=grid_spec,
        compiler_params=pltpu.CompilerParams(
            # TODO(synk): megacore ("parallel") split of the chunk axis with
            # per-core partial accumulators not implemented (v7x 2-TC win).
            dimension_semantics=("arbitrary",),
            vmem_limit_bytes=budget),
    )(wparams, out_s, gt1_s, tgt_s, gt2_s, t2_s, gt3_s, t3_s,
      gt4_r, t4_r, gt5_r, t5_r)
    return result[0]


# ---------------------------------------------------------------------------
# pure-JAX reference (mirrors the PyTorch module)
# ---------------------------------------------------------------------------
def _reference(gt_pre, out, target, wb=1.0, wd=1.0):
    def bcedice(pred, tgt):
        b = pred.shape[0]
        p = pred.reshape(b, -1).astype(jnp.float32)
        t = tgt.reshape(b, -1).astype(jnp.float32)
        bce = jnp.mean(-(t * jnp.maximum(jnp.log(p), -100.0)
                         + (1.0 - t) * jnp.maximum(jnp.log(1.0 - p), -100.0)))
        inter = jnp.sum(p * t, axis=1)
        score = (2.0 * inter + 1.0) / (jnp.sum(p, axis=1) + jnp.sum(t, axis=1) + 1.0)
        dice = 1.0 - jnp.sum(score) / b
        return wd * dice + wb * bce

    gt5, gt4, gt3, gt2, gt1 = gt_pre
    loss = bcedice(out, target)
    loss += bcedice(gt5, _max_pool2d(target, 16)) * 0.1
    loss += bcedice(gt4, _max_pool2d(target, 8)) * 0.2
    loss += bcedice(gt3, _max_pool2d(target, 4)) * 0.3
    loss += bcedice(gt2, _max_pool2d(target, 2)) * 0.4
    loss += bcedice(gt1, target) * 0.5
    return loss


if __name__ == "__main__":
    key = jax.random.PRNGKey(0)
    B, C, H, W = 2, 1, 32, 32

    keys = jax.random.split(key, 8)
    # Predictions are probabilities in (0, 1) (BCELoss requires this).
    out = jax.nn.sigmoid(jax.random.normal(keys[0], (B, C, H, W), jnp.float32))
    gt_pre = tuple(
        jax.nn.sigmoid(jax.random.normal(keys[1 + i], (B, C, H // k, W // k),
                                         jnp.float32))
        for i, k in enumerate((16, 8, 4, 2, 1))
    )
    # Binary segmentation target.
    target = (jax.random.uniform(keys[6], (B, C, H, W)) > 0.5).astype(jnp.float32)

    loss = edge_bce_dice_loss(gt_pre, out, target, wb=1.0, wd=1.0)
    loss = jax.block_until_ready(loss)

    ref = _reference(gt_pre, out, target, wb=1.0, wd=1.0)
    assert jnp.allclose(loss, ref, rtol=1e-3, atol=1e-3), (loss, ref)

    print("KERNEL_OK")
</pallas_src>

<mosaic_0001>
module attributes {stable_mosaic.version = 11 : i64} {
  func.func @_edge_bcedice_kernel(%arg0: i32, %arg1: memref<2xf32, #tpu.memory_space<smem>>, %arg2: memref<2x16x128xf32, #tpu.memory_space<vmem>>, %arg3: memref<2x16x128xf32, #tpu.memory_space<vmem>>, %arg4: memref<2x16x128xbf16, #tpu.memory_space<vmem>>, %arg5: memref<2x16x128xf32, #tpu.memory_space<vmem>>, %arg6: memref<2x16x128xbf16, #tpu.memory_space<vmem>>, %arg7: memref<2x16x128xf32, #tpu.memory_space<vmem>>, %arg8: memref<2x16x128xbf16, #tpu.memory_space<vmem>>, %arg9: memref<2x1x128xf32, #tpu.memory_space<vmem>>, %arg10: memref<2x1x128xbf16, #tpu.memory_space<vmem>>, %arg11: memref<2x1x128xf32, #tpu.memory_space<vmem>>, %arg12: memref<2x1x128xbf16, #tpu.memory_space<vmem>>, %arg13: memref<1xf32, #tpu.memory_space<smem>>, %arg14: memref<2x8x128xf32, #tpu.memory_space<vmem>>, %arg15: memref<2x8x128xf32, #tpu.memory_space<vmem>>, %arg16: memref<2x8x128xf32, #tpu.memory_space<vmem>>, %arg17: memref<2x8x128xf32, #tpu.memory_space<vmem>>, %arg18: memref<2x8x128xf32, #tpu.memory_space<vmem>>, %arg19: memref<2x8x128xf32, #tpu.memory_space<vmem>>, %arg20: memref<2x8x128xf32, #tpu.memory_space<vmem>>, %arg21: memref<2x8x128xf32, #tpu.memory_space<vmem>>, %arg22: memref<2x8x128xf32, #tpu.memory_space<vmem>>, %arg23: memref<2x8x128xf32, #tpu.memory_space<vmem>>, %arg24: memref<2x8x128xf32, #tpu.memory_space<vmem>>, %arg25: memref<2x8x128xf32, #tpu.memory_space<vmem>>, %arg26: memref<2x8x128xf32, #tpu.memory_space<vmem>>, %arg27: memref<2x8x128xf32, #tpu.memory_space<vmem>>, %arg28: memref<2x8x128xf32, #tpu.memory_space<vmem>>) attributes {dimension_semantics = [#tpu.dimension_semantics<arbitrary>], iteration_bounds = array<i64: 1>, scalar_prefetch = 0 : i64, scratch_operands = 15 : i64, tpu.core_type = #tpu.core_type<tc>, window_params = [{transform_indices = @transform_0, window_bounds = array<i64: 2>}, {transform_indices = @transform_1, window_bounds = array<i64: 2, 16, 128>}, {transform_indices = @transform_2, window_bounds = array<i64: 2, 16, 128>}, {transform_indices = @transform_3, window_bounds = array<i64: 2, 16, 128>}, {transform_indices = @transform_4, window_bounds = array<i64: 2, 16, 128>}, {transform_indices = @transform_5, window_bounds = array<i64: 2, 16, 128>}, {transform_indices = @transform_6, window_bounds = array<i64: 2, 16, 128>}, {transform_indices = @transform_7, window_bounds = array<i64: 2, 16, 128>}, {pipeline_mode = #tpu.pipeline_mode<synchronous>, transform_indices = @transform_8, window_bounds = array<i64: 2, 1, 128>}, {pipeline_mode = #tpu.pipeline_mode<synchronous>, transform_indices = @transform_9, window_bounds = array<i64: 2, 1, 128>}, {pipeline_mode = #tpu.pipeline_mode<synchronous>, transform_indices = @transform_10, window_bounds = array<i64: 2, 1, 128>}, {pipeline_mode = #tpu.pipeline_mode<synchronous>, transform_indices = @transform_11, window_bounds = array<i64: 2, 1, 128>}, {transform_indices = @transform_12, window_bounds = array<i64: 1>}]} {
    %c0_i32 = arith.constant 0 : i32
    %0 = arith.cmpi eq, %arg0, %c0_i32 : i32
    %1 = arith.extui %0 : i1 to i32
    %c0_i32_0 = arith.constant 0 : i32
    %2 = arith.cmpi ne, %1, %c0_i32_0 : i32
    scf.if %2 {
      %cst_143 = arith.constant 0.000000e+00 : f32
      %147 = vector.broadcast %cst_143 : f32 to vector<2x8x128xf32>
      %c0_144 = arith.constant 0 : index
      %c0_145 = arith.constant 0 : index
      %c0_146 = arith.constant 0 : index
      %148 = vector.load %arg14[%c0_144, %c0_145, %c0_146] : memref<2x8x128xf32, #tpu.memory_space<vmem>>, vector<2x8x128xf32>
      tpu.vector_store %arg14[%c0_144, %c0_145, %c0_146], %147 {strides = array<i32>} : memref<2x8x128xf32, #tpu.memory_space<vmem>>, vector<2x8x128xf32>,
      %cst_147 = arith.constant 0.000000e+00 : f32
      %149 = vector.broadcast %cst_147 : f32 to vector<2x8x128xf32>
      %c0_148 = arith.constant 0 : index
      %c0_149 = arith.constant 0 : index
      %c0_150 = arith.constant 0 : index
      %150 = vector.load %arg15[%c0_148, %c0_149, %c0_150] : memref<2x8x128xf32, #tpu.memory_space<vmem>>, vector<2x8x128xf32>
      tpu.vector_store %arg15[%c0_148, %c0_149, %c0_150], %149 {strides = array<i32>} : memref<2x8x128xf32, #tpu.memory_space<vmem>>, vector<2x8x128xf32>,
      %cst_151 = arith.constant 0.000000e+00 : f32
      %151 = vector.broadcast %cst_151 : f32 to vector<2x8x128xf32>
      %c0_152 = arith.constant 0 : index
      %c0_153 = arith.constant 0 : index
      %c0_154 = arith.constant 0 : index
      %152 = vector.load %arg16[%c0_152, %c0_153, %c0_154] : memref<2x8x128xf32, #tpu.memory_space<vmem>>, vector<2x8x128xf32>
      tpu.vector_store %arg16[%c0_152, %c0_153, %c0_154], %151 {strides = array<i32>} : memref<2x8x128xf32, #tpu.memory_space<vmem>>, vector<2x8x128xf32>,
      %cst_155 = arith.constant 0.000000e+00 : f32
      %153 = vector.broadcast %cst_155 : f32 to vector<2x8x128xf32>
      %c0_156 = arith.constant 0 : index
      %c0_157 = arith.constant 0 : index
      %c0_158 = arith.constant 0 : index
      %154 = vector.load %arg17[%c0_156, %c0_157, %c0_158] : memref<2x8x128xf32, #tpu.memory_space<vmem>>, vector<2x8x128xf32>
      tpu.vector_store %arg17[%c0_156, %c0_157, %c0_158], %153 {strides = array<i32>} : memref<2x8x128xf32, #tpu.memory_space<vmem>>, vector<2x8x128xf32>,
      %cst_159 = arith.constant 0.000000e+00 : f32
      %155 = vector.broadcast %cst_159 : f32 to vector<2x8x128xf32>
      %c0_160 = arith.constant 0 : index
      %c0_161 = arith.constant 0 : index
      %c0_162 = arith.constant 0 : index
      %156 = vector.load %arg18[%c0_160, %c0_161, %c0_162] : memref<2x8x128xf32, #tpu.memory_space<vmem>>, vector<2x8x128xf32>
      tpu.vector_store %arg18[%c0_160, %c0_161, %c0_162], %155 {strides = array<i32>} : memref<2x8x128xf32, #tpu.memory_space<vmem>>, vector<2x8x128xf32>,
      %cst_163 = arith.constant 0.000000e+00 : f32
      %157 = vector.broadcast %cst_163 : f32 to vector<2x8x128xf32>
      %c0_164 = arith.constant 0 : index
      %c0_165 = arith.constant 0 : index
      %c0_166 = arith.constant 0 : index
      %158 = vector.load %arg19[%c0_164, %c0_165, %c0_166] : memref<2x8x128xf32, #tpu.memory_space<vmem>>, vector<2x8x128xf32>
      tpu.vector_store %arg19[%c0_164, %c0_165, %c0_166], %157 {strides = array<i32>} : memref<2x8x128xf32, #tpu.memory_space<vmem>>, vector<2x8x128xf32>,
      %cst_167 = arith.constant 0.000000e+00 : f32
      %159 = vector.broadcast %cst_167 : f32 to vector<2x8x128xf32>
      %c0_168 = arith.constant 0 : index
      %c0_169 = arith.constant 0 : index
      %c0_170 = arith.constant 0 : index
      %160 = vector.load %arg20[%c0_168, %c0_169, %c0_170] : memref<2x8x128xf32, #tpu.memory_space<vmem>>, vector<2x8x128xf32>
      tpu.vector_store %arg20[%c0_168, %c0_169, %c0_170], %159 {strides = array<i32>} : memref<2x8x128xf32, #tpu.memory_space<vmem>>, vector<2x8x128xf32>,
      %cst_171 = arith.constant 0.000000e+00 : f32
      %161 = vector.broadcast %cst_171 : f32 to vector<2x8x128xf32>
      %c0_172 = arith.constant 0 : index
      %c0_173 = arith.constant 0 : index
      %c0_174 = arith.constant 0 : index
      %162 = vector.load %arg21[%c0_172, %c0_173, %c0_174] : memref<2x8x128xf32, #tpu.memory_space<vmem>>, vector<2x8x128xf32>
      tpu.vector_store %arg21[%c0_172, %c0_173, %c0_174], %161 {strides = array<i32>} : memref<2x8x128xf32, #tpu.memory_space<vmem>>, vector<2x8x128xf32>,
      %cst_175 = arith.constant 0.000000e+00 : f32
      %163 = vector.broadcast %cst_175 : f32 to vector<2x8x128xf32>
      %c0_176 = arith.constant 0 : index
      %c0_177 = arith.constant 0 : index
      %c0_178 = arith.constant 0 : index
      %164 = vector.load %arg22[%c0_176, %c0_177, %c0_178] : memref<2x8x128xf32, #tpu.memory_space<vmem>>, vector<2x8x128xf32>
      tpu.vector_store %arg22[%c0_176, %c0_177, %c0_178], %163 {strides = array<i32>} : memref<2x8x128xf32, #tpu.memory_space<vmem>>, vector<2x8x128xf32>,
      %cst_179 = arith.constant 0.000000e+00 : f32
      %165 = vector.broadcast %cst_179 : f32 to vector<2x8x128xf32>
      %c0_180 = arith.constant 0 : index
      %c0_181 = arith.constant 0 : index
      %c0_182 = arith.constant 0 : index
      %166 = vector.load %arg23[%c0_180, %c0_181, %c0_182] : memref<2x8x128xf32, #tpu.memory_space<vmem>>, vector<2x8x128xf32>
      tpu.vector_store %arg23[%c0_180, %c0_181, %c0_182], %165 {strides = array<i32>} : memref<2x8x128xf32, #tpu.memory_space<vmem>>, vector<2x8x128xf32>,
      %cst_183 = arith.constant 0.000000e+00 : f32
      %167 = vector.broadcast %cst_183 : f32 to vector<2x8x128xf32>
      %c0_184 = arith.constant 0 : index
      %c0_185 = arith.constant 0 : index
      %c0_186 = arith.constant 0 : index
      %168 = vector.load %arg24[%c0_184, %c0_185, %c0_186] : memref<2x8x128xf32, #tpu.memory_space<vmem>>, vector<2x8x128xf32>
      tpu.vector_store %arg24[%c0_184, %c0_185, %c0_186], %167 {strides = array<i32>} : memref<2x8x128xf32, #tpu.memory_space<vmem>>, vector<2x8x128xf32>,
      %cst_187 = arith.constant 0.000000e+00 : f32
      %169 = vector.broadcast %cst_187 : f32 to vector<2x8x128xf32>
      %c0_188 = arith.constant 0 : index
      %c0_189 = arith.constant 0 : index
      %c0_190 = arith.constant 0 : index
      %170 = vector.load %arg25[%c0_188, %c0_189, %c0_190] : memref<2x8x128xf32, #tpu.memory_space<vmem>>, vector<2x8x128xf32>
      tpu.vector_store %arg25[%c0_188, %c0_189, %c0_190], %169 {strides = array<i32>} : memref<2x8x128xf32, #tpu.memory_space<vmem>>, vector<2x8x128xf32>,
      %cst_191 = arith.constant 0.000000e+00 : f32
      %171 = vector.broadcast %cst_191 : f32 to vector<2x8x128xf32>
      %c0_192 = arith.constant 0 : index
      %c0_193 = arith.constant 0 : index
      %c0_194 = arith.constant 0 : index
      %172 = vector.load %arg26[%c0_192, %c0_193, %c0_194] : memref<2x8x128xf32, #tpu.memory_space<vmem>>, vector<2x8x128xf32>
      tpu.vector_store %arg26[%c0_192, %c0_193, %c0_194], %171 {strides = array<i32>} : memref<2x8x128xf32, #tpu.memory_space<vmem>>, vector<2x8x128xf32>,
      %cst_195 = arith.constant 0.000000e+00 : f32
      %173 = vector.broadcast %cst_195 : f32 to vector<2x8x128xf32>
      %c0_196 = arith.constant 0 : index
      %c0_197 = arith.constant 0 : index
      %c0_198 = arith.constant 0 : index
      %174 = vector.load %arg27[%c0_196, %c0_197, %c0_198] : memref<2x8x128xf32, #tpu.memory_space<vmem>>, vector<2x8x128xf32>
      tpu.vector_store %arg27[%c0_196, %c0_197, %c0_198], %173 {strides = array<i32>} : memref<2x8x128xf32, #tpu.memory_space<vmem>>, vector<2x8x128xf32>,
      %cst_199 = arith.constant 0.000000e+00 : f32
      %175 = vector.broadcast %cst_199 : f32 to vector<2x8x128xf32>
      %c0_200 = arith.constant 0 : index
      %c0_201 = arith.constant 0 : index
      %c0_202 = arith.constant 0 : index
      %176 = vector.load %arg28[%c0_200, %c0_201, %c0_202] : memref<2x8x128xf32, #tpu.memory_space<vmem>>, vector<2x8x128xf32>
      tpu.vector_store %arg28[%c0_200, %c0_201, %c0_202], %175 {strides = array<i32>} : memref<2x8x128xf32, #tpu.memory_space<vmem>>, vector<2x8x128xf32>,
    } else {
    }
    %c0 = arith.constant 0 : index
    %c0_1 = arith.constant 0 : index
    %c0_2 = arith.constant 0 : index
    %3 = vector.load %arg4[%c0, %c0_1, %c0_2] : memref<2x16x128xbf16, #tpu.memory_space<vmem>>, vector<2x16x128xbf16>
    %4 = arith.extf %3 : vector<2x16x128xbf16> to vector<2x16x128xf32>
    %c0_3 = arith.constant 0 : index
    %c0_4 = arith.constant 0 : index
    %c0_5 = arith.constant 0 : index
    %5 = vector.load %arg20[%c0_3, %c0_4, %c0_5] : memref<2x8x128xf32, #tpu.memory_space<vmem>>, vector<2x8x128xf32>
    %6 = vector.shape_cast %4 : vector<2x16x128xf32> to vector<2x2x8x128xf32>
    %cst = arith.constant dense<0.000000e+00> : vector<2x8x128xf32>
    %7 = vector.multi_reduction <add>, %6, %cst [1] : vector<2x2x8x128xf32> to vector<2x8x128xf32>
    %8 = arith.addf %5, %7 : vector<2x8x128xf32>
    %c0_6 = arith.constant 0 : index
    %c0_7 = arith.constant 0 : index
    %c0_8 = arith.constant 0 : index
    %9 = vector.load %arg20[%c0_6, %c0_7, %c0_8] : memref<2x8x128xf32, #tpu.memory_space<vmem>>, vector<2x8x128xf32>
    tpu.vector_store %arg20[%c0_6, %c0_7, %c0_8], %8 {strides = array<i32>} : memref<2x8x128xf32, #tpu.memory_space<vmem>>, vector<2x8x128xf32>,
    %c0_9 = arith.constant 0 : index
    %c0_10 = arith.constant 0 : index
    %c0_11 = arith.constant 0 : index
    %10 = vector.load %arg2[%c0_9, %c0_10, %c0_11] : memref<2x16x128xf32, #tpu.memory_space<vmem>>, vector<2x16x128xf32>
    %c0_12 = arith.constant 0 : index
    %c0_13 = arith.constant 0 : index
    %c0_14 = arith.constant 0 : index
    %11 = vector.load %arg14[%c0_12, %c0_13, %c0_14] : memref<2x8x128xf32, #tpu.memory_space<vmem>>, vector<2x8x128xf32>
    %12 = arith.mulf %10, %4 : vector<2x16x128xf32>
    %13 = vector.shape_cast %12 : vector<2x16x128xf32> to vector<2x2x8x128xf32>
    %cst_15 = arith.constant dense<0.000000e+00> : vector<2x8x128xf32>
    %14 = vector.multi_reduction <add>, %13, %cst_15 [1] : vector<2x2x8x128xf32> to vector<2x8x128xf32>
    %15 = arith.addf %11, %14 : vector<2x8x128xf32>
    %c0_16 = arith.constant 0 : index
    %c0_17 = arith.constant 0 : index
    %c0_18 = arith.constant 0 : index
    %16 = vector.load %arg14[%c0_16, %c0_17, %c0_18] : memref<2x8x128xf32, #tpu.memory_space<vmem>>, vector<2x8x128xf32>
    tpu.vector_store %arg14[%c0_16, %c0_17, %c0_18], %15 {strides = array<i32>} : memref<2x8x128xf32, #tpu.memory_space<vmem>>, vector<2x8x128xf32>,
    %c0_19 = arith.constant 0 : index
    %c0_20 = arith.constant 0 : index
    %c0_21 = arith.constant 0 : index
    %17 = vector.load %arg15[%c0_19, %c0_20, %c0_21] : memref<2x8x128xf32, #tpu.memory_space<vmem>>, vector<2x8x128xf32>
    %18 = vector.shape_cast %10 : vector<2x16x128xf32> to vector<2x2x8x128xf32>
    %cst_22 = arith.constant dense<0.000000e+00> : vector<2x8x128xf32>
    %19 = vector.multi_reduction <add>, %18, %cst_22 [1] : vector<2x2x8x128xf32> to vector<2x8x128xf32>
    %20 = arith.addf %17, %19 : vector<2x8x128xf32>
    %c0_23 = arith.constant 0 : index
    %c0_24 = arith.constant 0 : index
    %c0_25 = arith.constant 0 : index
    %21 = vector.load %arg15[%c0_23, %c0_24, %c0_25] : memref<2x8x128xf32, #tpu.memory_space<vmem>>, vector<2x8x128xf32>
    tpu.vector_store %arg15[%c0_23, %c0_24, %c0_25], %20 {strides = array<i32>} : memref<2x8x128xf32, #tpu.memory_space<vmem>>, vector<2x8x128xf32>,
    %c0_26 = arith.constant 0 : index
    %c0_27 = arith.constant 0 : index
    %c0_28 = arith.constant 0 : index
    %22 = vector.load %arg16[%c0_26, %c0_27, %c0_28] : memref<2x8x128xf32, #tpu.memory_space<vmem>>, vector<2x8x128xf32>
    %23 = math.log %10 : vector<2x16x128xf32>
    %cst_29 = arith.constant -1.000000e+02 : f32
    %24 = vector.broadcast %cst_29 : f32 to vector<2x16x128xf32>
    %25 = arith.maximumf %23, %24 : vector<2x16x128xf32>
    %cst_30 = arith.constant 1.000000e+00 : f32
    %26 = vector.broadcast %cst_30 : f32 to vector<2x16x128xf32>
    %27 = arith.subf %26, %10 : vector<2x16x128xf32>
    %28 = math.log %27 : vector<2x16x128xf32>
    %cst_31 = arith.constant -1.000000e+02 : f32
    %29 = vector.broadcast %cst_31 : f32 to vector<2x16x128xf32>
    %30 = arith.maximumf %28, %29 : vector<2x16x128xf32>
    %31 = arith.subf %25, %30 : vector<2x16x128xf32>
    %32 = arith.mulf %4, %31 : vector<2x16x128xf32>
    %33 = arith.addf %32, %30 : vector<2x16x128xf32>
    %cst_32 = arith.constant 0.000000e+00 : f32
    %34 = vector.broadcast %cst_32 : f32 to vector<2x16x128xf32>
    %35 = arith.subf %34, %33 : vector<2x16x128xf32>
    %36 = vector.shape_cast %35 : vector<2x16x128xf32> to vector<2x2x8x128xf32>
    %cst_33 = arith.constant dense<0.000000e+00> : vector<2x8x128xf32>
    %37 = vector.multi_reduction <add>, %36, %cst_33 [1] : vector<2x2x8x128xf32> to vector<2x8x128xf32>
    %38 = arith.addf %22, %37 : vector<2x8x128xf32>
    %c0_34 = arith.constant 0 : index
    %c0_35 = arith.constant 0 : index
    %c0_36 = arith.constant 0 : index
    %39 = vector.load %arg16[%c0_34, %c0_35, %c0_36] : memref<2x8x128xf32, #tpu.memory_space<vmem>>, vector<2x8x128xf32>
    tpu.vector_store %arg16[%c0_34, %c0_35, %c0_36], %38 {strides = array<i32>} : memref<2x8x128xf32, #tpu.memory_space<vmem>>, vector<2x8x128xf32>,
    %c0_37 = arith.constant 0 : index
    %c0_38 = arith.constant 0 : index
    %c0_39 = arith.constant 0 : index
    %40 = vector.load %arg3[%c0_37, %c0_38, %c0_39] : memref<2x16x128xf32, #tpu.memory_space<vmem>>, vector<2x16x128xf32>
    %c0_40 = arith.constant 0 : index
    %c0_41 = arith.constant 0 : index
    %c0_42 = arith.constant 0 : index
    %41 = vector.load %arg17[%c0_40, %c0_41, %c0_42] : memref<2x8x128xf32, #tpu.memory_space<vmem>>, vector<2x8x128xf32>
    %42 = arith.mulf %40, %4 : vector<2x16x128xf32>
    %43 = vector.shape_cast %42 : vector<2x16x128xf32> to vector<2x2x8x128xf32>
    %cst_43 = arith.constant dense<0.000000e+00> : vector<2x8x128xf32>
    %44 = vector.multi_reduction <add>, %43, %cst_43 [1] : vector<2x2x8x128xf32> to vector<2x8x128xf32>
    %45 = arith.addf %41, %44 : vector<2x8x128xf32>
    %c0_44 = arith.constant 0 : index
    %c0_45 = arith.constant 0 : index
    %c0_46 = arith.constant 0 : index
    %46 = vector.load %arg17[%c0_44, %c0_45, %c0_46] : memref<2x8x128xf32, #tpu.memory_space<vmem>>, vector<2x8x128xf32>
    tpu.vector_store %arg17[%c0_44, %c0_45, %c0_46], %45 {strides = array<i32>} : memref<2x8x128xf32, #tpu.memory_space<vmem>>, vector<2x8x128xf32>,
    %c0_47 = arith.constant 0 : index
    %c0_48 = arith.constant 0 : index
    %c0_49 = arith.constant 0 : index
    %47 = vector.load %arg18[%c0_47, %c0_48, %c0_49] : memref<2x8x128xf32, #tpu.memory_space<vmem>>, vector<2x8x128xf32>
    %48 = vector.shape_cast %40 : vector<2x16x128xf32> to vector<2x2x8x128xf32>
    %cst_50 = arith.constant dense<0.000000e+00> : vector<2x8x128xf32>
    %49 = vector.multi_reduction <add>, %48, %cst_50 [1] : vector<2x2x8x128xf32> to vector<2x8x128xf32>
    %50 = arith.addf %47, %49 : vector<2x8x128xf32>
    %c0_51 = arith.constant 0 : index
    %c0_52 = arith.constant 0 : index
    %c0_53 = arith.constant 0 : index
    %51 = vector.load %arg18[%c0_51, %c0_52, %c0_53] : memref<2x8x128xf32, #tpu.memory_space<vmem>>, vector<2x8x128xf32>
    tpu.vector_store %arg18[%c0_51, %c0_52, %c0_53], %50 {strides = array<i32>} : memref<2x8x128xf32, #tpu.memory_space<vmem>>, vector<2x8x128xf32>,
    %c0_54 = arith.constant 0 : index
    %c0_55 = arith.constant 0 : index
    %c0_56 = arith.constant 0 : index
    %52 = vector.load %arg19[%c0_54, %c0_55, %c0_56] : memref<2x8x128xf32, #tpu.memory_space<vmem>>, vector<2x8x128xf32>
    %53 = math.log %40 : vector<2x16x128xf32>
    %cst_57 = arith.constant -1.000000e+02 : f32
    %54 = vector.broadcast %cst_57 : f32 to vector<2x16x128xf32>
    %55 = arith.maximumf %53, %54 : vector<2x16x128xf32>
    %cst_58 = arith.constant 1.000000e+00 : f32
    %56 = vector.broadcast %cst_58 : f32 to vector<2x16x128xf32>
    %57 = arith.subf %56, %40 : vector<2x16x128xf32>
    %58 = math.log %57 : vector<2x16x128xf32>
    %cst_59 = arith.constant -1.000000e+02 : f32
    %59 = vector.broadcast %cst_59 : f32 to vector<2x16x128xf32>
    %60 = arith.maximumf %58, %59 : vector<2x16x128xf32>
    %61 = arith.subf %55, %60 : vector<2x16x128xf32>
    %62 = arith.mulf %4, %61 : vector<2x16x128xf32>
    %63 = arith.addf %62, %60 : vector<2x16x128xf32>
    %cst_60 = arith.constant 0.000000e+00 : f32
    %64 = vector.broadcast %cst_60 : f32 to vector<2x16x128xf32>
    %65 = arith.subf %64, %63 : vector<2x16x128xf32>
    %66 = vector.shape_cast %65 : vector<2x16x128xf32> to vector<2x2x8x128xf32>
    %cst_61 = arith.constant dense<0.000000e+00> : vector<2x8x128xf32>
    %67 = vector.multi_reduction <add>, %66, %cst_61 [1] : vector<2x2x8x128xf32> to vector<2x8x128xf32>
    %68 = arith.addf %52, %67 : vector<2x8x128xf32>
    %c0_62 = arith.constant 0 : index
    %c0_63 = arith.constant 0 : index
    %c0_64 = arith.constant 0 : index
    %69 = vector.load %arg19[%c0_62, %c0_63, %c0_64] : memref<2x8x128xf32, #tpu.memory_space<vmem>>, vector<2x8x128xf32>
    tpu.vector_store %arg19[%c0_62, %c0_63, %c0_64], %68 {strides = array<i32>} : memref<2x8x128xf32, #tpu.memory_space<vmem>>, vector<2x8x128xf32>,
    %c0_65 = arith.constant 0 : index
    %c0_66 = arith.constant 0 : index
    %c0_67 = arith.constant 0 : index
    %70 = vector.load %arg6[%c0_65, %c0_66, %c0_67] : memref<2x16x128xbf16, #tpu.memory_space<vmem>>, vector<2x16x128xbf16>
    %71 = arith.extf %70 : vector<2x16x128xbf16> to vector<2x16x128xf32>
    %c0_68 = arith.constant 0 : index
    %c0_69 = arith.constant 0 : index
    %c0_70 = arith.constant 0 : index
    %72 = vector.load %arg24[%c0_68, %c0_69, %c0_70] : memref<2x8x128xf32, #tpu.memory_space<vmem>>, vector<2x8x128xf32>
    %73 = vector.shape_cast %71 : vector<2x16x128xf32> to vector<2x2x8x128xf32>
    %cst_71 = arith.constant dense<0.000000e+00> : vector<2x8x128xf32>
    %74 = vector.multi_reduction <add>, %73, %cst_71 [1] : vector<2x2x8x128xf32> to vector<2x8x128xf32>
    %75 = arith.addf %72, %74 : vector<2x8x128xf32>
    %c0_72 = arith.constant 0 : index
    %c0_73 = arith.constant 0 : index
    %c0_74 = arith.constant 0 : index
    %76 = vector.load %arg24[%c0_72, %c0_73, %c0_74] : memref<2x8x128xf32, #tpu.memory_space<vmem>>, vector<2x8x128xf32>
    tpu.vector_store %arg24[%c0_72, %c0_73, %c0_74], %75 {strides = array<i32>} : memref<2x8x128xf32, #tpu.memory_space<vmem>>, vector<2x8x128xf32>,
    %c0_75 = arith.constant 0 : index
    %c0_76 = arith.constant 0 : index
    %c0_77 = arith.constant 0 : index
    %77 = vector.load %arg5[%c0_75, %c0_76, %c0_77] : memref<2x16x128xf32, #tpu.memory_space<vmem>>, vector<2x16x128xf32>
    %c0_78 = arith.constant 0 : index
    %c0_79 = arith.constant 0 : index
    %c0_80 = arith.constant 0 : index
    %78 = vector.load %arg21[%c0_78, %c0_79, %c0_80] : memref<2x8x128xf32, #tpu.memory_space<vmem>>, vector<2x8x128xf32>
    %79 = arith.mulf %77, %71 : vector<2x16x128xf32>
    %80 = vector.shape_cast %79 : vector<2x16x128xf32> to vector<2x2x8x128xf32>
    %cst_81 = arith.constant dense<0.000000e+00> : vector<2x8x128xf32>
    %81 = vector.multi_reduction <add>, %80, %cst_81 [1] : vector<2x2x8x128xf32> to vector<2x8x128xf32>
    %82 = arith.addf %78, %81 : vector<2x8x128xf32>
    %c0_82 = arith.constant 0 : index
    %c0_83 = arith.constant 0 : index
    %c0_84 = arith.constant 0 : index
    %83 = vector.load %arg21[%c0_82, %c0_83, %c0_84] : memref<2x8x128xf32, #tpu.memory_space<vmem>>, vector<2x8x128xf32>
    tpu.vector_store %arg21[%c0_82, %c0_83, %c0_84], %82 {strides = array<i32>} : memref<2x8x128xf32, #tpu.memory_space<vmem>>, vector<2x8x128xf32>,
    %c0_85 = arith.constant 0 : index
    %c0_86 = arith.constant 0 : index
    %c0_87 = arith.constant 0 : index
    %84 = vector.load %arg22[%c0_85, %c0_86, %c0_87] : memref<2x8x128xf32, #tpu.memory_space<vmem>>, vector<2x8x128xf32>
    %85 = vector.shape_cast %77 : vector<2x16x128xf32> to vector<2x2x8x128xf32>
    %cst_88 = arith.constant dense<0.000000e+00> : vector<2x8x128xf32>
    %86 = vector.multi_reduction <add>, %85, %cst_88 [1] : vector<2x2x8x128xf32> to vector<2x8x128xf32>
    %87 = arith.addf %84, %86 : vector<2x8x128xf32>
    %c0_89 = arith.constant 0 : index
    %c0_90 = arith.constant 0 : index
    %c0_91 = arith.constant 0 : index
    %88 = vector.load %arg22[%c0_89, %c0_90, %c0_91] : memref<2x8x128xf32, #tpu.memory_space<vmem>>, vector<2x8x128xf32>
    tpu.vector_store %arg22[%c0_89, %c0_90, %c0_91], %87 {strides = array<i32>} : memref<2x8x128xf32, #tpu.memory_space<vmem>>, vector<2x8x128xf32>,
    %c0_92 = arith.constant 0 : index
    %c0_93 = arith.constant 0 : index
    %c0_94 = arith.constant 0 : index
    %89 = vector.load %arg23[%c0_92, %c0_93, %c0_94] : memref<2x8x128xf32, #tpu.memory_space<vmem>>, vector<2x8x128xf32>
    %90 = math.log %77 : vector<2x16x128xf32>
    %cst_95 = arith.constant -1.000000e+02 : f32
    %91 = vector.broadcast %cst_95 : f32 to vector<2x16x128xf32>
    %92 = arith.maximumf %90, %91 : vector<2x16x128xf32>
    %cst_96 = arith.constant 1.000000e+00 : f32
    %93 = vector.broadcast %cst_96 : f32 to vector<2x16x128xf32>
    %94 = arith.subf %93, %77 : vector<2x16x128xf32>
    %95 = math.log %94 : vector<2x16x128xf32>
    %cst_97 = arith.constant -1.000000e+02 : f32
    %96 = vector.broadcast %cst_97 : f32 to vector<2x16x128xf32>
    %97 = arith.maximumf %95, %96 : vector<2x16x128xf32>
    %98 = arith.subf %92, %97 : vector<2x16x128xf32>
    %99 = arith.mulf %71, %98 : vector<2x16x128xf32>
    %100 = arith.addf %99, %97 : vector<2x16x128xf32>
    %cst_98 = arith.constant 0.000000e+00 : f32
    %101 = vector.broadcast %cst_98 : f32 to vector<2x16x128xf32>
    %102 = arith.subf %101, %100 : vector<2x16x128xf32>
    %103 = vector.shape_cast %102 : vector<2x16x128xf32> to vector<2x2x8x128xf32>
    %cst_99 = arith.constant dense<0.000000e+00> : vector<2x8x128xf32>
    %104 = vector.multi_reduction <add>, %103, %cst_99 [1] : vector<2x2x8x128xf32> to vector<2x8x128xf32>
    %105 = arith.addf %89, %104 : vector<2x8x128xf32>
    %c0_100 = arith.constant 0 : index
    %c0_101 = arith.constant 0 : index
    %c0_102 = arith.constant 0 : index
    %106 = vector.load %arg23[%c0_100, %c0_101, %c0_102] : memref<2x8x128xf32, #tpu.memory_space<vmem>>, vector<2x8x128xf32>
    tpu.vector_store %arg23[%c0_100, %c0_101, %c0_102], %105 {strides = array<i32>} : memref<2x8x128xf32, #tpu.memory_space<vmem>>, vector<2x8x128xf32>,
    %c0_103 = arith.constant 0 : index
    %c0_104 = arith.constant 0 : index
    %c0_105 = arith.constant 0 : index
    %107 = vector.load %arg8[%c0_103, %c0_104, %c0_105] : memref<2x16x128xbf16, #tpu.memory_space<vmem>>, vector<2x16x128xbf16>
    %108 = arith.extf %107 : vector<2x16x128xbf16> to vector<2x16x128xf32>
    %c0_106 = arith.constant 0 : index
    %c0_107 = arith.constant 0 : index
    %c0_108 = arith.constant 0 : index
    %109 = vector.load %arg28[%c0_106, %c0_107, %c0_108] : memref<2x8x128xf32, #tpu.memory_space<vmem>>, vector<2x8x128xf32>
    %110 = vector.shape_cast %108 : vector<2x16x128xf32> to vector<2x2x8x128xf32>
    %cst_109 = arith.constant dense<0.000000e+00> : vector<2x8x128xf32>
    %111 = vector.multi_reduction <add>, %110, %cst_109 [1] : vector<2x2x8x128xf32> to vector<2x8x128xf32>
    %112 = arith.addf %109, %111 : vector<2x8x128xf32>
    %c0_110 = arith.constant 0 : index
    %c0_111 = arith.constant 0 : index
    %c0_112 = arith.constant 0 : index
    %113 = vector.load %arg28[%c0_110, %c0_111, %c0_112] : memref<2x8x128xf32, #tpu.memory_space<vmem>>, vector<2x8x128xf32>
    tpu.vector_store %arg28[%c0_110, %c0_111, %c0_112], %112 {strides = array<i32>} : memref<2x8x128xf32, #tpu.memory_space<vmem>>, vector<2x8x128xf32>,
    %c0_113 = arith.constant 0 : index
    %c0_114 = arith.constant 0 : index
    %c0_115 = arith.constant 0 : index
    %114 = vector.load %arg7[%c0_113, %c0_114, %c0_115] : memref<2x16x128xf32, #tpu.memory_space<vmem>>, vector<2x16x128xf32>
    %c0_116 = arith.constant 0 : index
    %c0_117 = arith.constant 0 : index
    %c0_118 = arith.constant 0 : index
    %115 = vector.load %arg25[%c0_116, %c0_117, %c0_118] : memref<2x8x128xf32, #tpu.memory_space<vmem>>, vector<2x8x128xf32>
    %116 = arith.mulf %114, %108 : vector<2x16x128xf32>
    %117 = vector.shape_cast %116 : vector<2x16x128xf32> to vector<2x2x8x128xf32>
    %cst_119 = arith.constant dense<0.000000e+00> : vector<2x8x128xf32>
    %118 = vector.multi_reduction <add>, %117, %cst_119 [1] : vector<2x2x8x128xf32> to vector<2x8x128xf32>
    %119 = arith.addf %115, %118 : vector<2x8x128xf32>
    %c0_120 = arith.constant 0 : index
    %c0_121 = arith.constant 0 : index
    %c0_122 = arith.constant 0 : index
    %120 = vector.load %arg25[%c0_120, %c0_121, %c0_122] : memref<2x8x128xf32, #tpu.memory_space<vmem>>, vector<2x8x128xf32>
    tpu.vector_store %arg25[%c0_120, %c0_121, %c0_122], %119 {strides = array<i32>} : memref<2x8x128xf32, #tpu.memory_space<vmem>>, vector<2x8x128xf32>,
    %c0_123 = arith.constant 0 : index
    %c0_124 = arith.constant 0 : index
    %c0_125 = arith.constant 0 : index
    %121 = vector.load %arg26[%c0_123, %c0_124, %c0_125] : memref<2x8x128xf32, #tpu.memory_space<vmem>>, vector<2x8x128xf32>
    %122 = vector.shape_cast %114 : vector<2x16x128xf32> to vector<2x2x8x128xf32>
    %cst_126 = arith.constant dense<0.000000e+00> : vector<2x8x128xf32>
    %123 = vector.multi_reduction <add>, %122, %cst_126 [1] : vector<2x2x8x128xf32> to vector<2x8x128xf32>
    %124 = arith.addf %121, %123 : vector<2x8x128xf32>
    %c0_127 = arith.constant 0 : index
    %c0_128 = arith.constant 0 : index
    %c0_129 = arith.constant 0 : index
    %125 = vector.load %arg26[%c0_127, %c0_128, %c0_129] : memref<2x8x128xf32, #tpu.memory_space<vmem>>, vector<2x8x128xf32>
    tpu.vector_store %arg26[%c0_127, %c0_128, %c0_129], %124 {strides = array<i32>} : memref<2x8x128xf32, #tpu.memory_space<vmem>>, vector<2x8x128xf32>,
    %c0_130 = arith.constant 0 : index
    %c0_131 = arith.constant 0 : index
    %c0_132 = arith.constant 0 : index
    %126 = vector.load %arg27[%c0_130, %c0_131, %c0_132] : memref<2x8x128xf32, #tpu.memory_space<vmem>>, vector<2x8x128xf32>
    %127 = math.log %114 : vector<2x16x128xf32>
    %cst_133 = arith.constant -1.000000e+02 : f32
    %128 = vector.broadcast %cst_133 : f32 to vector<2x16x128xf32>
    %129 = arith.maximumf %127, %128 : vector<2x16x128xf32>
    %cst_134 = arith.constant 1.000000e+00 : f32
    %130 = vector.broadcast %cst_134 : f32 to vector<2x16x128xf32>
    %131 = arith.subf %130, %114 : vector<2x16x128xf32>
    %132 = math.log %131 : vector<2x16x128xf32>
    %cst_135 = arith.constant -1.000000e+02 : f32
    %133 = vector.broadcast %cst_135 : f32 to vector<2x16x128xf32>
    %134 = arith.maximumf %132, %133 : vector<2x16x128xf32>
    %135 = arith.subf %129, %134 : vector<2x16x128xf32>
    %136 = arith.mulf %108, %135 : vector<2x16x128xf32>
    %137 = arith.addf %136, %134 : vector<2x16x128xf32>
    %cst_136 = arith.constant 0.000000e+00 : f32
    %138 = vector.broadcast %cst_136 : f32 to vector<2x16x128xf32>
    %139 = arith.subf %138, %137 : vector<2x16x128xf32>
    %140 = vector.shape_cast %139 : vector<2x16x128xf32> to vector<2x2x8x128xf32>
    %cst_137 = arith.constant dense<0.000000e+00> : vector<2x8x128xf32>
    %141 = vector.multi_reduction <add>, %140, %cst_137 [1] : vector<2x2x8x128xf32> to vector<2x8x128xf32>
    %142 = arith.addf %126, %141 : vector<2x8x128xf32>
    %c0_138 = arith.constant 0 : index
    %c0_139 = arith.constant 0 : index
    %c0_140 = arith.constant 0 : index
    %143 = vector.load %arg27[%c0_138, %c0_139, %c0_140] : memref<2x8x128xf32, #tpu.memory_space<vmem>>, vector<2x8x128xf32>
    tpu.vector_store %arg27[%c0_138, %c0_139, %c0_140], %142 {strides = array<i32>} : memref<2x8x128xf32, #tpu.memory_space<vmem>>, vector<2x8x128xf32>,
    %c0_i32_141 = arith.constant 0 : i32
    %144 = arith.cmpi eq, %arg0, %c0_i32_141 : i32
    %145 = arith.extui %144 : i1 to i32
    %c0_i32_142 = arith.constant 0 : i32
    %146 = arith.cmpi ne, %145, %c0_i32_142 : i32
    scf.if %146 {
      %c0_143 = arith.constant 0 : index
      %147 = memref.load %arg1[%c0_143] : memref<2xf32, #tpu.memory_space<smem>>
      %c1 = arith.constant 1 : index
      %148 = memref.load %arg1[%c1] : memref<2xf32, #tpu.memory_space<smem>>
      %c0_144 = arith.constant 0 : index
      %c0_145 = arith.constant 0 : index
      %c0_146 = arith.constant 0 : index
      %149 = vector.load %arg20[%c0_144, %c0_145, %c0_146] : memref<2x8x128xf32, #tpu.memory_space<vmem>>, vector<2x8x128xf32>
      %cst_147 = arith.constant dense<0.000000e+00> : vector<2x8xf32>
      %150 = vector.multi_reduction <add>, %149, %cst_147 [2] : vector<2x8x128xf32> to vector<2x8xf32>
      %cst_148 = arith.constant dense<0.000000e+00> : vector<2xf32>
      %151 = vector.multi_reduction <add>, %150, %cst_148 [1] : vector<2x8xf32> to vector<2xf32>
      %152 = vector.shape_cast %151 : vector<2xf32> to vector<2x1xf32>
      %c0_149 = arith.constant 0 : index
      %c0_150 = arith.constant 0 : index
      %c0_151 = arith.constant 0 : index
      %153 = vector.load %arg16[%c0_149, %c0_150, %c0_151] : memref<2x8x128xf32, #tpu.memory_space<vmem>>, vector<2x8x128xf32>
      %cst_152 = arith.constant dense<0.000000e+00> : vector<2x8xf32>
      %154 = vector.multi_reduction <add>, %153, %cst_152 [2] : vector<2x8x128xf32> to vector<2x8xf32>
      %cst_153 = arith.constant dense<0.000000e+00> : vector<2xf32>
      %155 = vector.multi_reduction <add>, %154, %cst_153 [1] : vector<2x8xf32> to vector<2xf32>
      %156 = vector.shape_cast %155 : vector<2xf32> to vector<2x1xf32>
      %c0_154 = arith.constant 0 : index
      %c0_155 = arith.constant 0 : index
      %c0_156 = arith.constant 0 : index
      %157 = vector.load %arg14[%c0_154, %c0_155, %c0_156] : memref<2x8x128xf32, #tpu.memory_space<vmem>>, vector<2x8x128xf32>
      %cst_157 = arith.constant dense<0.000000e+00> : vector<2x8xf32>
      %158 = vector.multi_reduction <add>, %157, %cst_157 [2] : vector<2x8x128xf32> to vector<2x8xf32>
      %cst_158 = arith.constant dense<0.000000e+00> : vector<2xf32>
      %159 = vector.multi_reduction <add>, %158, %cst_158 [1] : vector<2x8xf32> to vector<2xf32>
      %160 = vector.shape_cast %159 : vector<2xf32> to vector<2x1xf32>
      %c0_159 = arith.constant 0 : index
      %c0_160 = arith.constant 0 : index
      %c0_161 = arith.constant 0 : index
      %161 = vector.load %arg15[%c0_159, %c0_160, %c0_161] : memref<2x8x128xf32, #tpu.memory_space<vmem>>, vector<2x8x128xf32>
      %cst_162 = arith.constant dense<0.000000e+00> : vector<2x8xf32>
      %162 = vector.multi_reduction <add>, %161, %cst_162 [2] : vector<2x8x128xf32> to vector<2x8xf32>
      %cst_163 = arith.constant dense<0.000000e+00> : vector<2xf32>
      %163 = vector.multi_reduction <add>, %162, %cst_163 [1] : vector<2x8xf32> to vector<2xf32>
      %164 = vector.shape_cast %163 : vector<2xf32> to vector<2x1xf32>
      %165 = vector.shape_cast %156 : vector<2x1xf32> to vector<1x2x1xf32>
      %cst_164 = arith.constant dense<0.000000e+00> : vector<1xf32>
      %166 = vector.multi_reduction <add>, %165, %cst_164 [1, 2] : vector<1x2x1xf32> to vector<1xf32>
      %167 = vector.shape_cast %166 : vector<1xf32> to vector<1x1x1xf32>
      %168 = vector.extract %167[0, 0, 0] : f32 from vector<1x1x1xf32>
      %cst_165 = arith.constant 4.8828125E-4 : f32
      %169 = arith.mulf %168, %cst_165 : f32
      %cst_166 = arith.constant 2.000000e+00 : f32
      %170 = vector.broadcast %cst_166 : f32 to vector<2x1xf32>
      %171 = arith.mulf %170, %160 : vector<2x1xf32>
      %cst_167 = arith.constant 1.000000e+00 : f32
      %172 = vector.broadcast %cst_167 : f32 to vector<2x1xf32>
      %173 = arith.addf %171, %172 : vector<2x1xf32>
      %174 = arith.addf %164, %152 : vector<2x1xf32>
      %cst_168 = arith.constant 1.000000e+00 : f32
      %175 = vector.broadcast %cst_168 : f32 to vector<2x1xf32>
      %176 = arith.addf %174, %175 : vector<2x1xf32>
      %177 = arith.divf %173, %176 : vector<2x1xf32>
      %178 = vector.shape_cast %177 : vector<2x1xf32> to vector<1x2x1xf32>
      %cst_169 = arith.constant dense<0.000000e+00> : vector<1xf32>
      %179 = vector.multi_reduction <add>, %178, %cst_169 [1, 2] : vector<1x2x1xf32> to vector<1xf32>
      %180 = vector.shape_cast %179 : vector<1xf32> to vector<1x1x1xf32>
      %181 = vector.extract %180[0, 0, 0] : f32 from vector<1x1x1xf32>
      %cst_170 = arith.constant 5.000000e-01 : f32
      %182 = arith.mulf %181, %cst_170 : f32
      %cst_171 = arith.constant 1.000000e+00 : f32
      %183 = arith.subf %cst_171, %182 : f32
      %184 = arith.mulf %148, %183 : f32
      %185 = arith.mulf %147, %169 : f32
      %186 = arith.addf %184, %185 : f32
      %c0_172 = arith.constant 0 : index
      %c0_173 = arith.constant 0 : index
      %c0_174 = arith.constant 0 : index
      %187 = vector.load %arg19[%c0_172, %c0_173, %c0_174] : memref<2x8x128xf32, #tpu.memory_space<vmem>>, vector<2x8x128xf32>
      %cst_175 = arith.constant dense<0.000000e+00> : vector<2x8xf32>
      %188 = vector.multi_reduction <add>, %187, %cst_175 [2] : vector<2x8x128xf32> to vector<2x8xf32>
      %cst_176 = arith.constant dense<0.000000e+00> : vector<2xf32>
      %189 = vector.multi_reduction <add>, %188, %cst_176 [1] : vector<2x8xf32> to vector<2xf32>
      %190 = vector.shape_cast %189 : vector<2xf32> to vector<2x1xf32>
      %c0_177 = arith.constant 0 : index
      %c0_178 = arith.constant 0 : index
      %c0_179 = arith.constant 0 : index
      %191 = vector.load %arg17[%c0_177, %c0_178, %c0_179] : memref<2x8x128xf32, #tpu.memory_space<vmem>>, vector<2x8x128xf32>
      %cst_180 = arith.constant dense<0.000000e+00> : vector<2x8xf32>
      %192 = vector.multi_reduction <add>, %191, %cst_180 [2] : vector<2x8x128xf32> to vector<2x8xf32>
      %cst_181 = arith.constant dense<0.000000e+00> : vector<2xf32>
      %193 = vector.multi_reduction <add>, %192, %cst_181 [1] : vector<2x8xf32> to vector<2xf32>
      %194 = vector.shape_cast %193 : vector<2xf32> to vector<2x1xf32>
      %c0_182 = arith.constant 0 : index
      %c0_183 = arith.constant 0 : index
      %c0_184 = arith.constant 0 : index
      %195 = vector.load %arg18[%c0_182, %c0_183, %c0_184] : memref<2x8x128xf32, #tpu.memory_space<vmem>>, vector<2x8x128xf32>
      %cst_185 = arith.constant dense<0.000000e+00> : vector<2x8xf32>
      %196 = vector.multi_reduction <add>, %195, %cst_185 [2] : vector<2x8x128xf32> to vector<2x8xf32>
      %cst_186 = arith.constant dense<0.000000e+00> : vector<2xf32>
      %197 = vector.multi_reduction <add>, %196, %cst_186 [1] : vector<2x8xf32> to vector<2xf32>
      %198 = vector.shape_cast %197 : vector<2xf32> to vector<2x1xf32>
      %199 = vector.shape_cast %190 : vector<2x1xf32> to vector<1x2x1xf32>
      %cst_187 = arith.constant dense<0.000000e+00> : vector<1xf32>
      %200 = vector.multi_reduction <add>, %199, %cst_187 [1, 2] : vector<1x2x1xf32> to vector<1xf32>
      %201 = vector.shape_cast %200 : vector<1xf32> to vector<1x1x1xf32>
      %202 = vector.extract %201[0, 0, 0] : f32 from vector<1x1x1xf32>
      %cst_188 = arith.constant 4.8828125E-4 : f32
      %203 = arith.mulf %202, %cst_188 : f32
      %cst_189 = arith.constant 2.000000e+00 : f32
      %204 = vector.broadcast %cst_189 : f32 to vector<2x1xf32>
      %205 = arith.mulf %204, %194 : vector<2x1xf32>
      %cst_190 = arith.constant 1.000000e+00 : f32
      %206 = vector.broadcast %cst_190 : f32 to vector<2x1xf32>
      %207 = arith.addf %205, %206 : vector<2x1xf32>
      %208 = arith.addf %198, %152 : vector<2x1xf32>
      %cst_191 = arith.constant 1.000000e+00 : f32
      %209 = vector.broadcast %cst_191 : f32 to vector<2x1xf32>
      %210 = arith.addf %208, %209 : vector<2x1xf32>
      %211 = arith.divf %207, %210 : vector<2x1xf32>
      %212 = vector.shape_cast %211 : vector<2x1xf32> to vector<1x2x1xf32>
      %cst_192 = arith.constant dense<0.000000e+00> : vector<1xf32>
      %213 = vector.multi_reduction <add>, %212, %cst_192 [1, 2] : vector<1x2x1xf32> to vector<1xf32>
      %214 = vector.shape_cast %213 : vector<1xf32> to vector<1x1x1xf32>
      %215 = vector.extract %214[0, 0, 0] : f32 from vector<1x1x1xf32>
      %cst_193 = arith.constant 5.000000e-01 : f32
      %216 = arith.mulf %215, %cst_193 : f32
      %cst_194 = arith.constant 1.000000e+00 : f32
      %217 = arith.subf %cst_194, %216 : f32
      %218 = arith.mulf %148, %217 : f32
      %219 = arith.mulf %147, %203 : f32
      %220 = arith.addf %218, %219 : f32
      %cst_195 = arith.constant 5.000000e-01 : f32
      %221 = arith.mulf %cst_195, %220 : f32
      %222 = arith.addf %186, %221 : f32
      %c0_196 = arith.constant 0 : index
      %c0_197 = arith.constant 0 : index
      %c0_198 = arith.constant 0 : index
      %223 = vector.load %arg23[%c0_196, %c0_197, %c0_198] : memref<2x8x128xf32, #tpu.memory_space<vmem>>, vector<2x8x128xf32>
      %cst_199 = arith.constant dense<0.000000e+00> : vector<2x8xf32>
      %224 = vector.multi_reduction <add>, %223, %cst_199 [2] : vector<2x8x128xf32> to vector<2x8xf32>
      %cst_200 = arith.constant dense<0.000000e+00> : vector<2xf32>
      %225 = vector.multi_reduction <add>, %224, %cst_200 [1] : vector<2x8xf32> to vector<2xf32>
      %226 = vector.shape_cast %225 : vector<2xf32> to vector<2x1xf32>
      %c0_201 = arith.constant 0 : index
      %c0_202 = arith.constant 0 : index
      %c0_203 = arith.constant 0 : index
      %227 = vector.load %arg21[%c0_201, %c0_202, %c0_203] : memref<2x8x128xf32, #tpu.memory_space<vmem>>, vector<2x8x128xf32>
      %cst_204 = arith.constant dense<0.000000e+00> : vector<2x8xf32>
      %228 = vector.multi_reduction <add>, %227, %cst_204 [2] : vector<2x8x128xf32> to vector<2x8xf32>
      %cst_205 = arith.constant dense<0.000000e+00> : vector<2xf32>
      %229 = vector.multi_reduction <add>, %228, %cst_205 [1] : vector<2x8xf32> to vector<2xf32>
      %230 = vector.shape_cast %229 : vector<2xf32> to vector<2x1xf32>
      %c0_206 = arith.constant 0 : index
      %c0_207 = arith.constant 0 : index
      %c0_208 = arith.constant 0 : index
      %231 = vector.load %arg22[%c0_206, %c0_207, %c0_208] : memref<2x8x128xf32, #tpu.memory_space<vmem>>, vector<2x8x128xf32>
      %cst_209 = arith.constant dense<0.000000e+00> : vector<2x8xf32>
      %232 = vector.multi_reduction <add>, %231, %cst_209 [2] : vector<2x8x128xf32> to vector<2x8xf32>
      %cst_210 = arith.constant dense<0.000000e+00> : vector<2xf32>
      %233 = vector.multi_reduction <add>, %232, %cst_210 [1] : vector<2x8xf32> to vector<2xf32>
      %234 = vector.shape_cast %233 : vector<2xf32> to vector<2x1xf32>
      %c0_211 = arith.constant 0 : index
      %c0_212 = arith.constant 0 : index
      %c0_213 = arith.constant 0 : index
      %235 = vector.load %arg24[%c0_211, %c0_212, %c0_213] : memref<2x8x128xf32, #tpu.memory_space<vmem>>, vector<2x8x128xf32>
      %cst_214 = arith.constant dense<0.000000e+00> : vector<2x8xf32>
      %236 = vector.multi_reduction <add>, %235, %cst_214 [2] : vector<2x8x128xf32> to vector<2x8xf32>
      %cst_215 = arith.constant dense<0.000000e+00> : vector<2xf32>
      %237 = vector.multi_reduction <add>, %236, %cst_215 [1] : vector<2x8xf32> to vector<2xf32>
      %238 = vector.shape_cast %237 : vector<2xf32> to vector<2x1xf32>
      %239 = vector.shape_cast %226 : vector<2x1xf32> to vector<1x2x1xf32>
      %cst_216 = arith.constant dense<0.000000e+00> : vector<1xf32>
      %240 = vector.multi_reduction <add>, %239, %cst_216 [1, 2] : vector<1x2x1xf32> to vector<1xf32>
      %241 = vector.shape_cast %240 : vector<1xf32> to vector<1x1x1xf32>
      %242 = vector.extract %241[0, 0, 0] : f32 from vector<1x1x1xf32>
      %cst_217 = arith.constant 0.001953125 : f32
      %243 = arith.mulf %242, %cst_217 : f32
      %cst_218 = arith.constant 2.000000e+00 : f32
      %244 = vector.broadcast %cst_218 : f32 to vector<2x1xf32>
      %245 = arith.mulf %244, %230 : vector<2x1xf32>
      %cst_219 = arith.constant 1.000000e+00 : f32
      %246 = vector.broadcast %cst_219 : f32 to vector<2x1xf32>
      %247 = arith.addf %245, %246 : vector<2x1xf32>
      %248 = arith.addf %234, %238 : vector<2x1xf32>
      %cst_220 = arith.constant 1.000000e+00 : f32
      %249 = vector.broadcast %cst_220 : f32 to vector<2x1xf32>
      %250 = arith.addf %248, %249 : vector<2x1xf32>
      %251 = arith.divf %247, %250 : vector<2x1xf32>
      %252 = vector.shape_cast %251 : vector<2x1xf32> to vector<1x2x1xf32>
      %cst_221 = arith.constant dense<0.000000e+00> : vector<1xf32>
      %253 = vector.multi_reduction <add>, %252, %cst_221 [1, 2] : vector<1x2x1xf32> to vector<1xf32>
      %254 = vector.shape_cast %253 : vector<1xf32> to vector<1x1x1xf32>
      %255 = vector.extract %254[0, 0, 0] : f32 from vector<1x1x1xf32>
      %cst_222 = arith.constant 5.000000e-01 : f32
      %256 = arith.mulf %255, %cst_222 : f32
      %cst_223 = arith.constant 1.000000e+00 : f32
      %257 = arith.subf %cst_223, %256 : f32
      %258 = arith.mulf %148, %257 : f32
      %259 = arith.mulf %147, %243 : f32
      %260 = arith.addf %258, %259 : f32
      %cst_224 = arith.constant 4.000000e-01 : f32
      %261 = arith.mulf %cst_224, %260 : f32
      %262 = arith.addf %222, %261 : f32
      %c0_225 = arith.constant 0 : index
      %c0_226 = arith.constant 0 : index
      %c0_227 = arith.constant 0 : index
      %263 = vector.load %arg27[%c0_225, %c0_226, %c0_227] : memref<2x8x128xf32, #tpu.memory_space<vmem>>, vector<2x8x128xf32>
      %cst_228 = arith.constant dense<0.000000e+00> : vector<2x8xf32>
      %264 = vector.multi_reduction <add>, %263, %cst_228 [2] : vector<2x8x128xf32> to vector<2x8xf32>
      %cst_229 = arith.constant dense<0.000000e+00> : vector<2xf32>
      %265 = vector.multi_reduction <add>, %264, %cst_229 [1] : vector<2x8xf32> to vector<2xf32>
      %266 = vector.shape_cast %265 : vector<2xf32> to vector<2x1xf32>
      %c0_230 = arith.constant 0 : index
      %c0_231 = arith.constant 0 : index
      %c0_232 = arith.constant 0 : index
      %267 = vector.load %arg25[%c0_230, %c0_231, %c0_232] : memref<2x8x128xf32, #tpu.memory_space<vmem>>, vector<2x8x128xf32>
      %cst_233 = arith.constant dense<0.000000e+00> : vector<2x8xf32>
      %268 = vector.multi_reduction <add>, %267, %cst_233 [2] : vector<2x8x128xf32> to vector<2x8xf32>
      %cst_234 = arith.constant dense<0.000000e+00> : vector<2xf32>
      %269 = vector.multi_reduction <add>, %268, %cst_234 [1] : vector<2x8xf32> to vector<2xf32>
      %270 = vector.shape_cast %269 : vector<2xf32> to vector<2x1xf32>
      %c0_235 = arith.constant 0 : index
      %c0_236 = arith.constant 0 : index
      %c0_237 = arith.constant 0 : index
      %271 = vector.load %arg26[%c0_235, %c0_236, %c0_237] : memref<2x8x128xf32, #tpu.memory_space<vmem>>, vector<2x8x128xf32>
      %cst_238 = arith.constant dense<0.000000e+00> : vector<2x8xf32>
      %272 = vector.multi_reduction <add>, %271, %cst_238 [2] : vector<2x8x128xf32> to vector<2x8xf32>
      %cst_239 = arith.constant dense<0.000000e+00> : vector<2xf32>
      %273 = vector.multi_reduction <add>, %272, %cst_239 [1] : vector<2x8xf32> to vector<2xf32>
      %274 = vector.shape_cast %273 : vector<2xf32> to vector<2x1xf32>
      %c0_240 = arith.constant 0 : index
      %c0_241 = arith.constant 0 : index
      %c0_242 = arith.constant 0 : index
      %275 = vector.load %arg28[%c0_240, %c0_241, %c0_242] : memref<2x8x128xf32, #tpu.memory_space<vmem>>, vector<2x8x128xf32>
      %cst_243 = arith.constant dense<0.000000e+00> : vector<2x8xf32>
      %276 = vector.multi_reduction <add>, %275, %cst_243 [2] : vector<2x8x128xf32> to vector<2x8xf32>
      %cst_244 = arith.constant dense<0.000000e+00> : vector<2xf32>
      %277 = vector.multi_reduction <add>, %276, %cst_244 [1] : vector<2x8xf32> to vector<2xf32>
      %278 = vector.shape_cast %277 : vector<2xf32> to vector<2x1xf32>
      %279 = vector.shape_cast %266 : vector<2x1xf32> to vector<1x2x1xf32>
      %cst_245 = arith.constant dense<0.000000e+00> : vector<1xf32>
      %280 = vector.multi_reduction <add>, %279, %cst_245 [1, 2] : vector<1x2x1xf32> to vector<1xf32>
      %281 = vector.shape_cast %280 : vector<1xf32> to vector<1x1x1xf32>
      %282 = vector.extract %281[0, 0, 0] : f32 from vector<1x1x1xf32>
      %cst_246 = arith.constant 7.812500e-03 : f32
      %283 = arith.mulf %282, %cst_246 : f32
      %cst_247 = arith.constant 2.000000e+00 : f32
      %284 = vector.broadcast %cst_247 : f32 to vector<2x1xf32>
      %285 = arith.mulf %284, %270 : vector<2x1xf32>
      %cst_248 = arith.constant 1.000000e+00 : f32
      %286 = vector.broadcast %cst_248 : f32 to vector<2x1xf32>
      %287 = arith.addf %285, %286 : vector<2x1xf32>
      %288 = arith.addf %274, %278 : vector<2x1xf32>
      %cst_249 = arith.constant 1.000000e+00 : f32
      %289 = vector.broadcast %cst_249 : f32 to vector<2x1xf32>
      %290 = arith.addf %288, %289 : vector<2x1xf32>
      %291 = arith.divf %287, %290 : vector<2x1xf32>
      %292 = vector.shape_cast %291 : vector<2x1xf32> to vector<1x2x1xf32>
      %cst_250 = arith.constant dense<0.000000e+00> : vector<1xf32>
      %293 = vector.multi_reduction <add>, %292, %cst_250 [1, 2] : vector<1x2x1xf32> to vector<1xf32>
      %294 = vector.shape_cast %293 : vector<1xf32> to vector<1x1x1xf32>
      %295 = vector.extract %294[0, 0, 0] : f32 from vector<1x1x1xf32>
      %cst_251 = arith.constant 5.000000e-01 : f32
      %296 = arith.mulf %295, %cst_251 : f32
      %cst_252 = arith.constant 1.000000e+00 : f32
      %297 = arith.subf %cst_252, %296 : f32
      %298 = arith.mulf %148, %297 : f32
      %299 = arith.mulf %147, %283 : f32
      %300 = arith.addf %298, %299 : f32
      %cst_253 = arith.constant 3.000000e-01 : f32
      %301 = arith.mulf %cst_253, %300 : f32
      %302 = arith.addf %262, %301 : f32
      %c0_254 = arith.constant 0 : index
      %c0_255 = arith.constant 0 : index
      %c0_256 = arith.constant 0 : index
      %303 = vector.load %arg9[%c0_254, %c0_255, %c0_256] : memref<2x1x128xf32, #tpu.memory_space<vmem>>, vector<2x1x128xf32>
      %c0_257 = arith.constant 0 : index
      %c0_258 = arith.constant 0 : index
      %c0_259 = arith.constant 0 : index
      %304 = vector.load %arg10[%c0_257, %c0_258, %c0_259] : memref<2x1x128xbf16, #tpu.memory_space<vmem>>, vector<2x1x128xbf16>
      %305 = arith.extf %304 : vector<2x1x128xbf16> to vector<2x1x128xf32>
      %306 = math.log %303 : vector<2x1x128xf32>
      %cst_260 = arith.constant -1.000000e+02 : f32
      %307 = vector.broadcast %cst_260 : f32 to vector<2x1x128xf32>
      %308 = arith.maximumf %306, %307 : vector<2x1x128xf32>
      %cst_261 = arith.constant 1.000000e+00 : f32
      %309 = vector.broadcast %cst_261 : f32 to vector<2x1x128xf32>
      %310 = arith.subf %309, %303 : vector<2x1x128xf32>
      %311 = math.log %310 : vector<2x1x128xf32>
      %cst_262 = arith.constant -1.000000e+02 : f32
      %312 = vector.broadcast %cst_262 : f32 to vector<2x1x128xf32>
      %313 = arith.maximumf %311, %312 : vector<2x1x128xf32>
      %314 = arith.subf %308, %313 : vector<2x1x128xf32>
      %315 = arith.mulf %305, %314 : vector<2x1x128xf32>
      %316 = arith.addf %315, %313 : vector<2x1x128xf32>
      %cst_263 = arith.constant 0.000000e+00 : f32
      %317 = vector.broadcast %cst_263 : f32 to vector<2x1x128xf32>
      %318 = arith.subf %317, %316 : vector<2x1x128xf32>
      %cst_264 = arith.constant dense<0.000000e+00> : vector<2x1xf32>
      %319 = vector.multi_reduction <add>, %318, %cst_264 [2] : vector<2x1x128xf32> to vector<2x1xf32>
      %cst_265 = arith.constant dense<0.000000e+00> : vector<2xf32>
      %320 = vector.multi_reduction <add>, %319, %cst_265 [1] : vector<2x1xf32> to vector<2xf32>
      %321 = vector.shape_cast %320 : vector<2xf32> to vector<2x1xf32>
      %322 = arith.mulf %303, %305 : vector<2x1x128xf32>
      %cst_266 = arith.constant dense<0.000000e+00> : vector<2x1xf32>
      %323 = vector.multi_reduction <add>, %322, %cst_266 [2] : vector<2x1x128xf32> to vector<2x1xf32>
      %cst_267 = arith.constant dense<0.000000e+00> : vector<2xf32>
      %324 = vector.multi_reduction <add>, %323, %cst_267 [1] : vector<2x1xf32> to vector<2xf32>
      %325 = vector.shape_cast %324 : vector<2xf32> to vector<2x1xf32>
      %cst_268 = arith.constant dense<0.000000e+00> : vector<2x1xf32>
      %326 = vector.multi_reduction <add>, %303, %cst_268 [2] : vector<2x1x128xf32> to vector<2x1xf32>
      %cst_269 = arith.constant dense<0.000000e+00> : vector<2xf32>
      %327 = vector.multi_reduction <add>, %326, %cst_269 [1] : vector<2x1xf32> to vector<2xf32>
      %328 = vector.shape_cast %327 : vector<2xf32> to vector<2x1xf32>
      %cst_270 = arith.constant dense<0.000000e+00> : vector<2x1xf32>
      %329 = vector.multi_reduction <add>, %305, %cst_270 [2] : vector<2x1x128xf32> to vector<2x1xf32>
      %cst_271 = arith.constant dense<0.000000e+00> : vector<2xf32>
      %330 = vector.multi_reduction <add>, %329, %cst_271 [1] : vector<2x1xf32> to vector<2xf32>
      %331 = vector.shape_cast %330 : vector<2xf32> to vector<2x1xf32>
      %332 = vector.shape_cast %321 : vector<2x1xf32> to vector<1x2x1xf32>
      %cst_272 = arith.constant dense<0.000000e+00> : vector<1xf32>
      %333 = vector.multi_reduction <add>, %332, %cst_272 [1, 2] : vector<1x2x1xf32> to vector<1xf32>
      %334 = vector.shape_cast %333 : vector<1xf32> to vector<1x1x1xf32>
      %335 = vector.extract %334[0, 0, 0] : f32 from vector<1x1x1xf32>
      %cst_273 = arith.constant 3.125000e-02 : f32
      %336 = arith.mulf %335, %cst_273 : f32
      %cst_274 = arith.constant 2.000000e+00 : f32
      %337 = vector.broadcast %cst_274 : f32 to vector<2x1xf32>
      %338 = arith.mulf %337, %325 : vector<2x1xf32>
      %cst_275 = arith.constant 1.000000e+00 : f32
      %339 = vector.broadcast %cst_275 : f32 to vector<2x1xf32>
      %340 = arith.addf %338, %339 : vector<2x1xf32>
      %341 = arith.addf %328, %331 : vector<2x1xf32>
      %cst_276 = arith.constant 1.000000e+00 : f32
      %342 = vector.broadcast %cst_276 : f32 to vector<2x1xf32>
      %343 = arith.addf %341, %342 : vector<2x1xf32>
      %344 = arith.divf %340, %343 : vector<2x1xf32>
      %345 = vector.shape_cast %344 : vector<2x1xf32> to vector<1x2x1xf32>
      %cst_277 = arith.constant dense<0.000000e+00> : vector<1xf32>
      %346 = vector.multi_reduction <add>, %345, %cst_277 [1, 2] : vector<1x2x1xf32> to vector<1xf32>
      %347 = vector.shape_cast %346 : vector<1xf32> to vector<1x1x1xf32>
      %348 = vector.extract %347[0, 0, 0] : f32 from vector<1x1x1xf32>
      %cst_278 = arith.constant 5.000000e-01 : f32
      %349 = arith.mulf %348, %cst_278 : f32
      %cst_279 = arith.constant 1.000000e+00 : f32
      %350 = arith.subf %cst_279, %349 : f32
      %351 = arith.mulf %148, %350 : f32
      %352 = arith.mulf %147, %336 : f32
      %353 = arith.addf %351, %352 : f32
      %cst_280 = arith.constant 2.000000e-01 : f32
      %354 = arith.mulf %cst_280, %353 : f32
      %355 = arith.addf %302, %354 : f32
      %c0_281 = arith.constant 0 : index
      %c0_282 = arith.constant 0 : index
      %c0_283 = arith.constant 0 : index
      %356 = vector.load %arg11[%c0_281, %c0_282, %c0_283] : memref<2x1x128xf32, #tpu.memory_space<vmem>>, vector<2x1x128xf32>
      %c0_284 = arith.constant 0 : index
      %c0_285 = arith.constant 0 : index
      %c0_286 = arith.constant 0 : index
      %357 = vector.load %arg12[%c0_284, %c0_285, %c0_286] : memref<2x1x128xbf16, #tpu.memory_space<vmem>>, vector<2x1x128xbf16>
      %358 = arith.extf %357 : vector<2x1x128xbf16> to vector<2x1x128xf32>
      %359 = math.log %356 : vector<2x1x128xf32>
      %cst_287 = arith.constant -1.000000e+02 : f32
      %360 = vector.broadcast %cst_287 : f32 to vector<2x1x128xf32>
      %361 = arith.maximumf %359, %360 : vector<2x1x128xf32>
      %cst_288 = arith.constant 1.000000e+00 : f32
      %362 = vector.broadcast %cst_288 : f32 to vector<2x1x128xf32>
      %363 = arith.subf %362, %356 : vector<2x1x128xf32>
      %364 = math.log %363 : vector<2x1x128xf32>
      %cst_289 = arith.constant -1.000000e+02 : f32
      %365 = vector.broadcast %cst_289 : f32 to vector<2x1x128xf32>
      %366 = arith.maximumf %364, %365 : vector<2x1x128xf32>
      %367 = arith.subf %361, %366 : vector<2x1x128xf32>
      %368 = arith.mulf %358, %367 : vector<2x1x128xf32>
      %369 = arith.addf %368, %366 : vector<2x1x128xf32>
      %cst_290 = arith.constant 0.000000e+00 : f32
      %370 = vector.broadcast %cst_290 : f32 to vector<2x1x128xf32>
      %371 = arith.subf %370, %369 : vector<2x1x128xf32>
      %cst_291 = arith.constant dense<0.000000e+00> : vector<2x1xf32>
      %372 = vector.multi_reduction <add>, %371, %cst_291 [2] : vector<2x1x128xf32> to vector<2x1xf32>
      %cst_292 = arith.constant dense<0.000000e+00> : vector<2xf32>
      %373 = vector.multi_reduction <add>, %372, %cst_292 [1] : vector<2x1xf32> to vector<2xf32>
      %374 = vector.shape_cast %373 : vector<2xf32> to vector<2x1xf32>
      %375 = arith.mulf %356, %358 : vector<2x1x128xf32>
      %cst_293 = arith.constant dense<0.000000e+00> : vector<2x1xf32>
      %376 = vector.multi_reduction <add>, %375, %cst_293 [2] : vector<2x1x128xf32> to vector<2x1xf32>
      %cst_294 = arith.constant dense<0.000000e+00> : vector<2xf32>
      %377 = vector.multi_reduction <add>, %376, %cst_294 [1] : vector<2x1xf32> to vector<2xf32>
      %378 = vector.shape_cast %377 : vector<2xf32> to vector<2x1xf32>
      %cst_295 = arith.constant dense<0.000000e+00> : vector<2x1xf32>
      %379 = vector.multi_reduction <add>, %356, %cst_295 [2] : vector<2x1x128xf32> to vector<2x1xf32>
      %cst_296 = arith.constant dense<0.000000e+00> : vector<2xf32>
      %380 = vector.multi_reduction <add>, %379, %cst_296 [1] : vector<2x1xf32> to vector<2xf32>
      %381 = vector.shape_cast %380 : vector<2xf32> to vector<2x1xf32>
      %cst_297 = arith.constant dense<0.000000e+00> : vector<2x1xf32>
      %382 = vector.multi_reduction <add>, %358, %cst_297 [2] : vector<2x1x128xf32> to vector<2x1xf32>
      %cst_298 = arith.constant dense<0.000000e+00> : vector<2xf32>
      %383 = vector.multi_reduction <add>, %382, %cst_298 [1] : vector<2x1xf32> to vector<2xf32>
      %384 = vector.shape_cast %383 : vector<2xf32> to vector<2x1xf32>
      %385 = vector.shape_cast %374 : vector<2x1xf32> to vector<1x2x1xf32>
      %cst_299 = arith.constant dense<0.000000e+00> : vector<1xf32>
      %386 = vector.multi_reduction <add>, %385, %cst_299 [1, 2] : vector<1x2x1xf32> to vector<1xf32>
      %387 = vector.shape_cast %386 : vector<1xf32> to vector<1x1x1xf32>
      %388 = vector.extract %387[0, 0, 0] : f32 from vector<1x1x1xf32>
      %cst_300 = arith.constant 1.250000e-01 : f32
      %389 = arith.mulf %388, %cst_300 : f32
      %cst_301 = arith.constant 2.000000e+00 : f32
      %390 = vector.broadcast %cst_301 : f32 to vector<2x1xf32>
      %391 = arith.mulf %390, %378 : vector<2x1xf32>
      %cst_302 = arith.constant 1.000000e+00 : f32
      %392 = vector.broadcast %cst_302 : f32 to vector<2x1xf32>
      %393 = arith.addf %391, %392 : vector<2x1xf32>
      %394 = arith.addf %381, %384 : vector<2x1xf32>
      %cst_303 = arith.constant 1.000000e+00 : f32
      %395 = vector.broadcast %cst_303 : f32 to vector<2x1xf32>
      %396 = arith.addf %394, %395 : vector<2x1xf32>
      %397 = arith.divf %393, %396 : vector<2x1xf32>
      %398 = vector.shape_cast %397 : vector<2x1xf32> to vector<1x2x1xf32>
      %cst_304 = arith.constant dense<0.000000e+00> : vector<1xf32>
      %399 = vector.multi_reduction <add>, %398, %cst_304 [1, 2] : vector<1x2x1xf32> to vector<1xf32>
      %400 = vector.shape_cast %399 : vector<1xf32> to vector<1x1x1xf32>
      %401 = vector.extract %400[0, 0, 0] : f32 from vector<1x1x1xf32>
      %cst_305 = arith.constant 5.000000e-01 : f32
      %402 = arith.mulf %401, %cst_305 : f32
      %cst_306 = arith.constant 1.000000e+00 : f32
      %403 = arith.subf %cst_306, %402 : f32
      %404 = arith.mulf %148, %403 : f32
      %405 = arith.mulf %147, %389 : f32
      %406 = arith.addf %404, %405 : f32
      %cst_307 = arith.constant 1.000000e-01 : f32
      %407 = arith.mulf %cst_307, %406 : f32
      %408 = arith.addf %355, %407 : f32
      %c0_308 = arith.constant 0 : index
      %409 = memref.load %arg13[%c0_308] : memref<1xf32, #tpu.memory_space<smem>>
      memref.store %408, %arg13[%c0_308] : memref<1xf32, #tpu.memory_space<smem>>
    } else {
    }
    return
  }
  func.func @transform_0(%arg0: i32) -> i32 {
    %c0_i32 = arith.constant 0 : i32
    %c0_i32_0 = arith.constant 0 : i32
    return %c0_i32 : i32
  }
  func.func @transform_1(%arg0: i32) -> (i32, i32, i32) {
    %c0_i32 = arith.constant 0 : i32
    %c0_i32_0 = arith.constant 0 : i32
    %c0_i32_1 = arith.constant 0 : i32
    return %c0_i32, %arg0, %c0_i32_0 : i32, i32, i32
  }
  func.func @transform_2(%arg0: i32) -> (i32, i32, i32) {
    %c0_i32 = arith.constant 0 : i32
    %c0_i32_0 = arith.constant 0 : i32
    %c0_i32_1 = arith.constant 0 : i32
    return %c0_i32, %arg0, %c0_i32_0 : i32, i32, i32
  }
  func.func @transform_3(%arg0: i32) -> (i32, i32, i32) {
    %c0_i32 = arith.constant 0 : i32
    %c0_i32_0 = arith.constant 0 : i32
    %c0_i32_1 = arith.constant 0 : i32
    return %c0_i32, %arg0, %c0_i32_0 : i32, i32, i32
  }
  func.func @transform_4(%arg0: i32) -> (i32, i32, i32) {
    %c0_i32 = arith.constant 0 : i32
    %c0_i32_0 = arith.constant 0 : i32
    %c0_i32_1 = arith.constant 0 : i32
    return %c0_i32, %arg0, %c0_i32_0 : i32, i32, i32
  }
  func.func @transform_5(%arg0: i32) -> (i32, i32, i32) {
    %c0_i32 = arith.constant 0 : i32
    %c0_i32_0 = arith.constant 0 : i32
    %c0_i32_1 = arith.constant 0 : i32
    return %c0_i32, %arg0, %c0_i32_0 : i32, i32, i32
  }
  func.func @transform_6(%arg0: i32) -> (i32, i32, i32) {
    %c0_i32 = arith.constant 0 : i32
    %c0_i32_0 = arith.constant 0 : i32
    %c0_i32_1 = arith.constant 0 : i32
    return %c0_i32, %arg0, %c0_i32_0 : i32, i32, i32
  }
  func.func @transform_7(%arg0: i32) -> (i32, i32, i32) {
    %c0_i32 = arith.constant 0 : i32
    %c0_i32_0 = arith.constant 0 : i32
    %c0_i32_1 = arith.constant 0 : i32
    return %c0_i32, %arg0, %c0_i32_0 : i32, i32, i32
  }
  func.func @transform_8(%arg0: i32) -> (i32, i32, i32) {
    %c0_i32 = arith.constant 0 : i32
    %c0_i32_0 = arith.constant 0 : i32
    %c0_i32_1 = arith.constant 0 : i32
    %c0_i32_2 = arith.constant 0 : i32
    return %c0_i32, %c0_i32_0, %c0_i32_1 : i32, i32, i32
  }
  func.func @transform_9(%arg0: i32) -> (i32, i32, i32) {
    %c0_i32 = arith.constant 0 : i32
    %c0_i32_0 = arith.constant 0 : i32
    %c0_i32_1 = arith.constant 0 : i32
    %c0_i32_2 = arith.constant 0 : i32
    return %c0_i32, %c0_i32_0, %c0_i32_1 : i32, i32, i32
  }
  func.func @transform_10(%arg0: i32) -> (i32, i32, i32) {
    %c0_i32 = arith.constant 0 : i32
    %c0_i32_0 = arith.constant 0 : i32
    %c0_i32_1 = arith.constant 0 : i32
    %c0_i32_2 = arith.constant 0 : i32
    return %c0_i32, %c0_i32_0, %c0_i32_1 : i32, i32, i32
  }
  func.func @transform_11(%arg0: i32) -> (i32, i32, i32) {
    %c0_i32 = arith.constant 0 : i32
    %c0_i32_0 = arith.constant 0 : i32
    %c0_i32_1 = arith.constant 0 : i32
    %c0_i32_2 = arith.constant 0 : i32
    return %c0_i32, %c0_i32_0, %c0_i32_1 : i32, i32, i32
  }
  func.func @transform_12(%arg0: i32) -> i32 {
    %c0_i32 = arith.constant 0 : i32
    %c0_i32_0 = arith.constant 0 : i32
    return %c0_i32 : i32
  }
}

</mosaic_0001>

<llo_original>
// kernel: tpu_custom_call.1
$region0: #{tpu_custom_call.1}
  #allocation0 [shape = 'u32[]', space=smem, size = 0x4, offset = 0x4, fixed_abs, tag = 'smem constant byte address 0x4 - core index']
  #allocation1 [shape = 'u32[144,128]{1,0:T(1,128)}', space=vmem, size = 0x12000, scoped, tag = 'internal scratch']
  #allocation2 [shape = 'f32[2,8,128]{2,1,0:T(8,128)}', space=vmem, size = 0x2000, scoped, tag = 'scratch operand']
  #allocation3 [shape = 'f32[2,8,128]{2,1,0:T(8,128)}', space=vmem, size = 0x2000, scoped, tag = 'scratch operand']
  #allocation4 [shape = 'f32[2,8,128]{2,1,0:T(8,128)}', space=vmem, size = 0x2000, scoped, tag = 'scratch operand']
  #allocation5 [shape = 'f32[2,8,128]{2,1,0:T(8,128)}', space=vmem, size = 0x2000, scoped, tag = 'scratch operand']
  #allocation6 [shape = 'f32[2,8,128]{2,1,0:T(8,128)}', space=vmem, size = 0x2000, scoped, tag = 'scratch operand']
  #allocation7 [shape = 'f32[2,8,128]{2,1,0:T(8,128)}', space=vmem, size = 0x2000, scoped, tag = 'scratch operand']
  #allocation8 [shape = 'f32[2,8,128]{2,1,0:T(8,128)}', space=vmem, size = 0x2000, scoped, tag = 'scratch operand']
  #allocation9 [shape = 'f32[2,8,128]{2,1,0:T(8,128)}', space=vmem, size = 0x2000, scoped, tag = 'scratch operand']
  #allocation10 [shape = 'f32[2,8,128]{2,1,0:T(8,128)}', space=vmem, size = 0x2000, scoped, tag = 'scratch operand']
  #allocation11 [shape = 'f32[2,8,128]{2,1,0:T(8,128)}', space=vmem, size = 0x2000, scoped, tag = 'scratch operand']
  #allocation12 [shape = 'f32[2,8,128]{2,1,0:T(8,128)}', space=vmem, size = 0x2000, scoped, tag = 'scratch operand']
  #allocation13 [shape = 'f32[2,8,128]{2,1,0:T(8,128)}', space=vmem, size = 0x2000, scoped, tag = 'scratch operand']
  #allocation14 [shape = 'f32[2,8,128]{2,1,0:T(8,128)}', space=vmem, size = 0x2000, scoped, tag = 'scratch operand']
  #allocation15 [shape = 'f32[2,8,128]{2,1,0:T(8,128)}', space=vmem, size = 0x2000, scoped, tag = 'scratch operand']
  #allocation16 [shape = 'f32[2,8,128]{2,1,0:T(8,128)}', space=vmem, size = 0x2000, scoped, tag = 'scratch operand']
  %s0 = inlined_call_operand.hbm [shape: f32[2], index: 0, kind: input, shape index: {}]
  %s1 = inlined_call_operand.hbm [shape: f32[2,16,128], index: 1, kind: input, shape index: {}]
  %s2 = inlined_call_operand.hbm [shape: f32[2,16,128], index: 2, kind: input, shape index: {}]
  %s3 = inlined_call_operand.vmem [shape: bf16[2,16,128], index: 3, kind: input, shape index: {}]
  %s4 = inlined_call_operand.hbm [shape: f32[2,16,128], index: 4, kind: input, shape index: {}]
  %s5 = inlined_call_operand.hbm [shape: bf16[2,16,128], index: 5, kind: input, shape index: {}]
  %s6 = inlined_call_operand.hbm [shape: f32[2,16,128], index: 6, kind: input, shape index: {}]
  %s7 = inlined_call_operand.vmem [shape: bf16[2,16,128], index: 7, kind: input, shape index: {}]
  %s8 = inlined_call_operand.vmem [shape: f32[2,1,128], index: 8, kind: input, shape index: {}]
  %s9 = inlined_call_operand.vmem [shape: bf16[2,1,128], index: 9, kind: input, shape index: {}]
  %s10 = inlined_call_operand.vmem [shape: f32[2,1,128], index: 10, kind: input, shape index: {}]
  %s11 = inlined_call_operand.vmem [shape: bf16[2,1,128], index: 11, kind: input, shape index: {}]
  %s12 = inlined_call_operand.hbm [shape: f32[1], index: 12, kind: output, shape index: {}]
  %s13 = sld [smem:[#allocation0]]
  $region90: #{tpu_custom_call.1} parent=0
    _
  %s15 = ssub.s32 1, %s13
  %s16 = scalar_select 0, %s15, %s13
  $region1: #{tpu_custom_call.1} parent=0
    #allocation17 [shape = 'u8[512]{0}', space=smem, size = 0x200, scoped, tag = 'input window, operand 0, single buffered']
    #allocation18 [shape = 's32[1]{0}', space=sflag, size = 0x4, scoped, tag = 'scoped memory for tpu_custom_call.1']
    #allocation19 [shape = 's32[1]{0}', space=sflag, size = 0x4, scoped, tag = 'scoped memory for tpu_custom_call.1']
    #allocation20 [shape = 's32[1]{0}', space=sflag, size = 0x4, scoped, tag = 'scoped memory for tpu_custom_call.1']
    #allocation21 [shape = 'u8[16384]{0}', space=vmem, size = 0x4000, scoped, tag = 'input window, operand 1, single buffered']
    #allocation22 [shape = 'u8[16384]{0}', space=vmem, size = 0x4000, scoped, tag = 'input window, operand 2, single buffered']
    #allocation23 [shape = 's32[1]{0}', space=sflag, size = 0x4, scoped, tag = 'scoped memory for tpu_custom_call.1']
    #allocation24 [shape = 'u8[16384]{0}', space=vmem, size = 0x4000, scoped, tag = 'input window, operand 4, single buffered']
    #allocation25 [shape = 'u8[8192]{0}', space=vmem, size = 0x2000, scoped, tag = 'input window, operand 5, single buffered']
    #allocation26 [shape = 's32[1]{0}', space=sflag, size = 0x4, scoped, tag = 'scoped memory for tpu_custom_call.1']
    #allocation27 [shape = 'u8[16384]{0}', space=vmem, size = 0x4000, scoped, tag = 'input window, operand 6, single buffered']
    #allocation28 [shape = 'u8[512]{0}', space=smem, size = 0x200, scoped, tag = 'output window, operand 0, single buffered']
    %17 = vsyncpa [#allocation19], 0
    %18 = vsyncpa [#allocation18], 0
    %19 = vsyncpa [#allocation23], 0
    %20 = vsyncpa [#allocation26], 0
    %21 = vsyncpa [#allocation20], 0
    // Predicated region
    $region2: #{tpu_custom_call.1} parent=1 // pred_check
      _
    $region3: #{tpu_custom_call.1} parent=1 // pred_check_branch
      %23 = sbr.rel (0) target = $region5
    $region4: #{tpu_custom_call.1} parent=1 // pred_region
      %s25 = ssub.s32 16, 16
      %26 = vsyncadd [#allocation19], %s25
      %29 = dma.hbm_to_smem %s0, 16, [#allocation17], [#allocation19]
    $region5: #{tpu_custom_call.1} parent=1 // pred_fallthru
      _
    // Predicated region
    $region6: #{tpu_custom_call.1} parent=1 // pred_check
      _
    $region7: #{tpu_custom_call.1} parent=1 // pred_check_branch
      %31 = sbr.rel (0) target = $region9
    $region8: #{tpu_custom_call.1} parent=1 // pred_region
      %s33 = ssub.s32 512, 512
      %34 = vsyncadd [#allocation18], %s33
      %s35 = sshll.u32 [#allocation21], 4
      %s36 = int_to_ptr.vmem [resolvable:$true] %s35
      %41 = dma.hbm_to_vmem [thread:$0]  %s1, 512, %s36, [#allocation18], 128, 128, 8
    $region9: #{tpu_custom_call.1} parent=1 // pred_fallthru
      _
    // Predicated region
    $region10: #{tpu_custom_call.1} parent=1 // pred_check
      _
    $region11: #{tpu_custom_call.1} parent=1 // pred_check_branch
      %43 = sbr.rel (0) target = $region13
    $region12: #{tpu_custom_call.1} parent=1 // pred_region
      %s45 = ssub.s32 512, 512
      %46 = vsyncadd [#allocation23], %s45
      %s47 = sshll.u32 [#allocation22], 4
      %s48 = int_to_ptr.vmem [resolvable:$true] %s47
      %53 = dma.hbm_to_vmem [thread:$0]  %s2, 512, %s48, [#allocation23], 128, 128, 8
    $region13: #{tpu_custom_call.1} parent=1 // pred_fallthru
      _
    // Predicated region
    $region14: #{tpu_custom_call.1} parent=1 // pred_check
      _
    $region15: #{tpu_custom_call.1} parent=1 // pred_check_branch
      %55 = sbr.rel (0) target = $region17
    $region16: #{tpu_custom_call.1} parent=1 // pred_region
      _
    $region17: #{tpu_custom_call.1} parent=1 // pred_fallthru
      _
    // Predicated region
    $region18: #{tpu_custom_call.1} parent=1 // pred_check
      _
    $region19: #{tpu_custom_call.1} parent=1 // pred_check_branch
      %57 = sbr.rel (0) target = $region21
    $region20: #{tpu_custom_call.1} parent=1 // pred_region
      %s59 = ssub.s32 512, 512
      %60 = vsyncadd [#allocation23], %s59
      %s61 = sshll.u32 [#allocation24], 4
      %s62 = int_to_ptr.vmem [resolvable:$true] %s61
      %67 = dma.hbm_to_vmem [thread:$0]  %s4, 512, %s62, [#allocation23], 128, 128, 8
    $region21: #{tpu_custom_call.1} parent=1 // pred_fallthru
      _
    // Predicated region
    $region22: #{tpu_custom_call.1} parent=1 // pred_check
      _
    $region23: #{tpu_custom_call.1} parent=1 // pred_check_branch
      %69 = sbr.rel (0) target = $region25
    $region24: #{tpu_custom_call.1} parent=1 // pred_region
      %s71 = ssub.s32 256, 256
      %72 = vsyncadd [#allocation26], %s71
      %s73 = sshll.u32 [#allocation25], 4
      %s74 = int_to_ptr.vmem [resolvable:$true] %s73
      %79 = dma.hbm_to_vmem [thread:$0]  %s5, 256, %s74, [#allocation26], 64, 64, 4
    $region25: #{tpu_custom_call.1} parent=1 // pred_fallthru
      _
    // Predicated region
    $region26: #{tpu_custom_call.1} parent=1 // pred_check
      _
    $region27: #{tpu_custom_call.1} parent=1 // pred_check_branch
      %81 = sbr.rel (0) target = $region29
    $region28: #{tpu_custom_call.1} parent=1 // pred_region
      %s83 = ssub.s32 512, 512
      %84 = vsyncadd [#allocation26], %s83
      %s85 = sshll.u32 [#allocation27], 4
      %s86 = int_to_ptr.vmem [resolvable:$true] %s85
      %91 = dma.hbm_to_vmem [thread:$0]  %s6, 512, %s86, [#allocation26], 128, 128, 8
    $region29: #{tpu_custom_call.1} parent=1 // pred_fallthru
      _
    // Predicated region
    $region30: #{tpu_custom_call.1} parent=1 // pred_check
      _
    $region31: #{tpu_custom_call.1} parent=1 // pred_check_branch
      %93 = sbr.rel (0) target = $region33
    $region32: #{tpu_custom_call.1} parent=1 // pred_region
      _
    $region33: #{tpu_custom_call.1} parent=1 // pred_fallthru
      _
    // Predicated region
    $region34: #{tpu_custom_call.1} parent=1 // pred_check
      _
    $region35: #{tpu_custom_call.1} parent=1 // pred_check_branch
      %95 = sbr.rel (0) target = $region37
    $region36: #{tpu_custom_call.1} parent=1 // pred_region
      _
    $region37: #{tpu_custom_call.1} parent=1 // pred_fallthru
      _
    // Predicated region
    $region38: #{tpu_custom_call.1} parent=1 // pred_check
      _
    $region39: #{tpu_custom_call.1} parent=1 // pred_check_branch
      %97 = sbr.rel (0) target = $region41
    $region40: #{tpu_custom_call.1} parent=1 // pred_region
      _
    $region41: #{tpu_custom_call.1} parent=1 // pred_fallthru
      _
    // Predicated region
    $region42: #{tpu_custom_call.1} parent=1 // pred_check
      _
    $region43: #{tpu_custom_call.1} parent=1 // pred_check_branch
      %99 = sbr.rel (0) target = $region45
    $region44: #{tpu_custom_call.1} parent=1 // pred_region
      _
    $region45: #{tpu_custom_call.1} parent=1 // pred_fallthru
      _
    // Predicated region
    $region46: #{tpu_custom_call.1} parent=1 // pred_check
      _
    $region47: #{tpu_custom_call.1} parent=1 // pred_check_branch
      %101 = sbr.rel (0) target = $region49
    $region48: #{tpu_custom_call.1} parent=1 // pred_region
      _
    $region49: #{tpu_custom_call.1} parent=1 // pred_fallthru
      _
    // Predicated region
    $region50: #{tpu_custom_call.1} parent=1 // pred_check
      _
    $region51: #{tpu_custom_call.1} parent=1 // pred_check_branch
      %103 = sbr.rel (0) target = $region53
    $region52: #{tpu_custom_call.1} parent=1 // pred_region
      %104 = dma.done [#allocation19], 16
    $region53: #{tpu_custom_call.1} parent=1 // pred_fallthru
      _
    // Predicated region
    $region54: #{tpu_custom_call.1} parent=1 // pred_check
      _
    $region55: #{tpu_custom_call.1} parent=1 // pred_check_branch
      %106 = sbr.rel (0) target = $region57
    $region56: #{tpu_custom_call.1} parent=1 // pred_region
      %107 = dma.done [#allocation18], 512
    $region57: #{tpu_custom_call.1} parent=1 // pred_fallthru
      _
    // Predicated region
    $region58: #{tpu_custom_call.1} parent=1 // pred_check
      _
    $region59: #{tpu_custom_call.1} parent=1 // pred_check_branch
      %109 = sbr.rel (0) target = $region61
    $region60: #{tpu_custom_call.1} parent=1 // pred_region
      %110 = dma.done [#allocation23], 512
    $region61: #{tpu_custom_call.1} parent=1 // pred_fallthru
      _
    // Predicated region
    $region62: #{tpu_custom_call.1} parent=1 // pred_check
      _
    $region63: #{tpu_custom_call.1} parent=1 // pred_check_branch
      %112 = sbr.rel (0) target = $region65
    $region64: #{tpu_custom_call.1} parent=1 // pred_region
      %113 = dma.done [#allocation23], 512
    $region65: #{tpu_custom_call.1} parent=1 // pred_fallthru
      _
    // Predicated region
    $region66: #{tpu_custom_call.1} parent=1 // pred_check
      _
    $region67: #{tpu_custom_call.1} parent=1 // pred_check_branch
      %115 = sbr.rel (0) target = $region69
    $region68: #{tpu_custom_call.1} parent=1 // pred_region
      %116 = dma.done [#allocation26], 256
    $region69: #{tpu_custom_call.1} parent=1 // pred_fallthru
      _
    // Predicated region
    $region70: #{tpu_custom_call.1} parent=1 // pred_check
      _
    $region71: #{tpu_custom_call.1} parent=1 // pred_check_branch
      %118 = sbr.rel (0) target = $region73
    $region72: #{tpu_custom_call.1} parent=1 // pred_region
      %119 = dma.done [#allocation26], 512
    $region73: #{tpu_custom_call.1} parent=1 // pred_fallthru
      _
    %120 = sfence
    %p121 = scmp.eq.s32.totalorder 0, 0
    // Predicated region
    $region74: #{tpu_custom_call.1} parent=1 // pred_check
      %p122 = pneg %p121
    $region75: #{tpu_custom_call.1} parent=1 // pred_check_branch
      %124 = sbr.rel (%p122) target = $region77
    $region76: #{tpu_custom_call.1} parent=1 // pred_region
      %125 = vst [vmem:[#allocation2] sm:$0xff] 0.0
      %126 = vst [vmem:[#allocation2 + $0x8] sm:$0xff] 0.0
      %127 = vst [vmem:[#allocation3] sm:$0xff] 0.0
      %128 = vst [vmem:[#allocation3 + $0x8] sm:$0xff] 0.0
      %129 = vst [vmem:[#allocation4] sm:$0xff] 0.0
      %130 = vst [vmem:[#allocation4 + $0x8] sm:$0xff] 0.0
      %131 = vst [vmem:[#allocation5] sm:$0xff] 0.0
      %132 = vst [vmem:[#allocation5 + $0x8] sm:$0xff] 0.0
      %133 = vst [vmem:[#allocation6] sm:$0xff] 0.0
      %134 = vst [vmem:[#allocation6 + $0x8] sm:$0xff] 0.0
      %135 = vst [vmem:[#allocation7] sm:$0xff] 0.0
      %136 = vst [vmem:[#allocation7 + $0x8] sm:$0xff] 0.0
      %137 = vst [vmem:[#allocation8] sm:$0xff] 0.0
      %138 = vst [vmem:[#allocation8 + $0x8] sm:$0xff] 0.0
      %139 = vst [vmem:[#allocation9] sm:$0xff] 0.0
      %140 = vst [vmem:[#allocation9 + $0x8] sm:$0xff] 0.0
      %141 = vst [vmem:[#allocation10] sm:$0xff] 0.0
      %142 = vst [vmem:[#allocation10 + $0x8] sm:$0xff] 0.0
      %143 = vst [vmem:[#allocation11] sm:$0xff] 0.0
      %144 = vst [vmem:[#allocation11 + $0x8] sm:$0xff] 0.0
      %145 = vst [vmem:[#allocation12] sm:$0xff] 0.0
      %146 = vst [vmem:[#allocation12 + $0x8] sm:$0xff] 0.0
      %147 = vst [vmem:[#allocation13] sm:$0xff] 0.0
      %148 = vst [vmem:[#allocation13 + $0x8] sm:$0xff] 0.0
      %149 = vst [vmem:[#allocation14] sm:$0xff] 0.0
      %150 = vst [vmem:[#allocation14 + $0x8] sm:$0xff] 0.0
      %151 = vst [vmem:[#allocation15] sm:$0xff] 0.0
      %152 = vst [vmem:[#allocation15 + $0x8] sm:$0xff] 0.0
      %153 = vst [vmem:[#allocation16] sm:$0xff] 0.0
      %154 = vst [vmem:[#allocation16 + $0x8] sm:$0xff] 0.0
    $region77: #{tpu_custom_call.1} parent=1 // pred_fallthru
      _
    %v155 = vld [vmem:[%s3] sm:$0xf]
    %v156 = vld [vmem:[%s3 + $0x4] sm:$0xf]
    %v157 = vld [vmem:[%s3 + $0x8] sm:$0xf]
    %v158 = vld [vmem:[%s3 + $0xc] sm:$0xf]
    %v159 = vunpack.c.l.bf16 %v155
    %v160 = vunpack.c.l.bf16 %v156
    %v161 = vunpack.c.l.bf16 %v157
    %v162 = vunpack.c.l.bf16 %v158
    %v163 = vld [vmem:[#allocation8] sm:$0xff]
    %v164 = vld [vmem:[#allocation8 + $0x8] sm:$0xff]
    %v165 = vadd.f32 %v159, %v160
    %v166 = vadd.f32 %v161, %v162
    %v167 = vadd.f32 %v163, %v165
    %v168 = vadd.f32 %v164, %v166
    %169 = vst [vmem:[#allocation8] sm:$0xff] %v167
    %170 = vst [vmem:[#allocation8 + $0x8] sm:$0xff] %v168
    %v171 = vld [vmem:[#allocation21] sm:$0xff]
    %v172 = vld [vmem:[#allocation21 + $0x8] sm:$0xff]
    %v173 = vld [vmem:[#allocation21 + $0x10] sm:$0xff]
    %v174 = vld [vmem:[#allocation21 + $0x18] sm:$0xff]
    %v175 = vld [vmem:[#allocation2] sm:$0xff]
    %v176 = vld [vmem:[#allocation2 + $0x8] sm:$0xff]
    %v177 = vmul.f32 %v171, %v159
    %v178 = vmul.f32 %v172, %v160
    %v179 = vmul.f32 %v173, %v161
    %v180 = vmul.f32 %v174, %v162
    %v181 = vadd.f32 %v177, %v178
    %v182 = vadd.f32 %v179, %v180
    %v183 = vadd.f32 %v175, %v181
    %v184 = vadd.f32 %v176, %v182
    %185 = vst [vmem:[#allocation2] sm:$0xff] %v183
    %186 = vst [vmem:[#allocation2 + $0x8] sm:$0xff] %v184
    %v187 = vld [vmem:[#allocation3] sm:$0xff]
    %v188 = vld [vmem:[#allocation3 + $0x8] sm:$0xff]
    %v189 = vadd.f32 %v171, %v172
    %v190 = vadd.f32 %v173, %v174
    %v191 = vadd.f32 %v187, %v189
    %v192 = vadd.f32 %v188, %v190
    %193 = vst [vmem:[#allocation3] sm:$0xff] %v191
    %194 = vst [vmem:[#allocation3 + $0x8] sm:$0xff] %v192
    %v195 = vld [vmem:[#allocation4] sm:$0xff]
    %v196 = vld [vmem:[#allocation4 + $0x8] sm:$0xff]
    %v197 = vlog2.pop %v171
    %v198 = vmul.f32 %v197, 0.6931472
    %v199 = vlog2.pop %v172
    %v200 = vmul.f32 %v199, 0.6931472
    %v201 = vlog2.pop %v173
    %v202 = vmul.f32 %v201, 0.6931472
    %v203 = vlog2.pop %v174
    %v204 = vmul.f32 %v203, 0.6931472
    %v205 = vmax.f32 %v198, -100.0
    %v206 = vmax.f32 %v200, -100.0
    %v207 = vmax.f32 %v202, -100.0
    %v208 = vmax.f32 %v204, -100.0
    %v209 = vsub.f32 1.0, %v171
    %v210 = vsub.f32 1.0, %v172
    %v211 = vsub.f32 1.0, %v173
    %v212 = vsub.f32 1.0, %v174
    %v213 = vlog2.pop %v209
    %v214 = vmul.f32 %v213, 0.6931472
    %v215 = vlog2.pop %v210
    %v216 = vmul.f32 %v215, 0.6931472
    %v217 = vlog2.pop %v211
    %v218 = vmul.f32 %v217, 0.6931472
    %v219 = vlog2.pop %v212
    %v220 = vmul.f32 %v219, 0.6931472
    %v221 = vmax.f32 %v214, -100.0
    %v222 = vmax.f32 %v216, -100.0
    %v223 = vmax.f32 %v218, -100.0
    %v224 = vmax.f32 %v220, -100.0
    %v225 = vsub.f32 %v205, %v221
    %v226 = vsub.f32 %v206, %v222
    %v227 = vsub.f32 %v207, %v223
    %v228 = vsub.f32 %v208, %v224
    %v229 = vmul.f32 %v159, %v225
    %v230 = vmul.f32 %v160, %v226
    %v231 = vmul.f32 %v161, %v227
    %v232 = vmul.f32 %v162, %v228
    %v233 = vadd.f32 %v229, %v221
    %v234 = vadd.f32 %v230, %v222
    %v235 = vadd.f32 %v231, %v223
    %v236 = vadd.f32 %v232, %v224
    %v237 = vsub.f32 0.0, %v233
    %v238 = vsub.f32 0.0, %v234
    %v239 = vsub.f32 0.0, %v235
    %v240 = vsub.f32 0.0, %v236
    %v241 = vadd.f32 %v237, %v238
    %v242 = vadd.f32 %v239, %v240
    %v243 = vadd.f32 %v195, %v241
    %v244 = vadd.f32 %v196, %v242
    %245 = vst [vmem:[#allocation4] sm:$0xff] %v243
    %246 = vst [vmem:[#allocation4 + $0x8] sm:$0xff] %v244
    %v247 = vld [vmem:[#allocation22] sm:$0xff]
    %v248 = vld [vmem:[#allocation22 + $0x8] sm:$0xff]
    %v249 = vld [vmem:[#allocation22 + $0x10] sm:$0xff]
    %v250 = vld [vmem:[#allocation22 + $0x18] sm:$0xff]
    %v251 = vld [vmem:[#allocation5] sm:$0xff]
    %v252 = vld [vmem:[#allocation5 + $0x8] sm:$0xff]
    %v253 = vmul.f32 %v247, %v159
    %v254 = vmul.f32 %v248, %v160
    %v255 = vmul.f32 %v249, %v161
    %v256 = vmul.f32 %v250, %v162
    %v257 = vadd.f32 %v253, %v254
    %v258 = vadd.f32 %v255, %v256
    %v259 = vadd.f32 %v251, %v257
    %v260 = vadd.f32 %v252, %v258
    %261 = vst [vmem:[#allocation5] sm:$0xff] %v259
    %262 = vst [vmem:[#allocation5 + $0x8] sm:$0xff] %v260
    %v263 = vld [vmem:[#allocation6] sm:$0xff]
    %v264 = vld [vmem:[#allocation6 + $0x8] sm:$0xff]
    %v265 = vadd.f32 %v247, %v248
    %v266 = vadd.f32 %v249, %v250
    %v267 = vadd.f32 %v263, %v265
    %v268 = vadd.f32 %v264, %v266
    %269 = vst [vmem:[#allocation6] sm:$0xff] %v267
    %270 = vst [vmem:[#allocation6 + $0x8] sm:$0xff] %v268
    %v271 = vld [vmem:[#allocation7] sm:$0xff]
    %v272 = vld [vmem:[#allocation7 + $0x8] sm:$0xff]
    %v273 = vlog2.pop %v247
    %v274 = vmul.f32 %v273, 0.6931472
    %v275 = vlog2.pop %v248
    %v276 = vmul.f32 %v275, 0.6931472
    %v277 = vlog2.pop %v249
    %v278 = vmul.f32 %v277, 0.6931472
    %v279 = vlog2.pop %v250
    %v280 = vmul.f32 %v279, 0.6931472
    %v281 = vmax.f32 %v274, -100.0
    %v282 = vmax.f32 %v276, -100.0
    %v283 = vmax.f32 %v278, -100.0
    %v284 = vmax.f32 %v280, -100.0
    %v285 = vsub.f32 1.0, %v247
    %v286 = vsub.f32 1.0, %v248
    %v287 = vsub.f32 1.0, %v249
    %v288 = vsub.f32 1.0, %v250
    %v289 = vlog2.pop %v285
    %v290 = vmul.f32 %v289, 0.6931472
    %v291 = vlog2.pop %v286
    %v292 = vmul.f32 %v291, 0.6931472
    %v293 = vlog2.pop %v287
    %v294 = vmul.f32 %v293, 0.6931472
    %v295 = vlog2.pop %v288
    %v296 = vmul.f32 %v295, 0.6931472
    %v297 = vmax.f32 %v290, -100.0
    %v298 = vmax.f32 %v292, -100.0
    %v299 = vmax.f32 %v294, -100.0
    %v300 = vmax.f32 %v296, -100.0
    %v301 = vsub.f32 %v281, %v297
    %v302 = vsub.f32 %v282, %v298
    %v303 = vsub.f32 %v283, %v299
    %v304 = vsub.f32 %v284, %v300
    %v305 = vmul.f32 %v159, %v301
    %v306 = vmul.f32 %v160, %v302
    %v307 = vmul.f32 %v161, %v303
    %v308 = vmul.f32 %v162, %v304
    %v309 = vadd.f32 %v305, %v297
    %v310 = vadd.f32 %v306, %v298
    %v311 = vadd.f32 %v307, %v299
    %v312 = vadd.f32 %v308, %v300
    %v313 = vsub.f32 0.0, %v309
    %v314 = vsub.f32 0.0, %v310
    %v315 = vsub.f32 0.0, %v311
    %v316 = vsub.f32 0.0, %v312
    %v317 = vadd.f32 %v313, %v314
    %v318 = vadd.f32 %v315, %v316
    %v319 = vadd.f32 %v271, %v317
    %v320 = vadd.f32 %v272, %v318
    %321 = vst [vmem:[#allocation7] sm:$0xff] %v319
    %322 = vst [vmem:[#allocation7 + $0x8] sm:$0xff] %v320
    %v323 = vld [vmem:[#allocation25] sm:$0xf]
    %v324 = vld [vmem:[#allocation25 + $0x4] sm:$0xf]
    %v325 = vld [vmem:[#allocation25 + $0x8] sm:$0xf]
    %v326 = vld [vmem:[#allocation25 + $0xc] sm:$0xf]
    %v327 = vunpack.c.l.bf16 %v323
    %v328 = vunpack.c.l.bf16 %v324
    %v329 = vunpack.c.l.bf16 %v325
    %v330 = vunpack.c.l.bf16 %v326
    %v331 = vld [vmem:[#allocation12] sm:$0xff]
    %v332 = vld [vmem:[#allocation12 + $0x8] sm:$0xff]
    %v333 = vadd.f32 %v327, %v328
    %v334 = vadd.f32 %v329, %v330
    %v335 = vadd.f32 %v331, %v333
    %v336 = vadd.f32 %v332, %v334
    %337 = vst [vmem:[#allocation12] sm:$0xff] %v335
    %338 = vst [vmem:[#allocation12 + $0x8] sm:$0xff] %v336
    %v339 = vld [vmem:[#allocation24] sm:$0xff]
    %v340 = vld [vmem:[#allocation24 + $0x8] sm:$0xff]
    %v341 = vld [vmem:[#allocation24 + $0x10] sm:$0xff]
    %v342 = vld [vmem:[#allocation24 + $0x18] sm:$0xff]
    %v343 = vld [vmem:[#allocation9] sm:$0xff]
    %v344 = vld [vmem:[#allocation9 + $0x8] sm:$0xff]
    %v345 = vmul.f32 %v339, %v327
    %v346 = vmul.f32 %v340, %v328
    %v347 = vmul.f32 %v341, %v329
    %v348 = vmul.f32 %v342, %v330
    %v349 = vadd.f32 %v345, %v346
    %v350 = vadd.f32 %v347, %v348
    %v351 = vadd.f32 %v343, %v349
    %v352 = vadd.f32 %v344, %v350
    %353 = vst [vmem:[#allocation9] sm:$0xff] %v351
    %354 = vst [vmem:[#allocation9 + $0x8] sm:$0xff] %v352
    %v355 = vld [vmem:[#allocation10] sm:$0xff]
    %v356 = vld [vmem:[#allocation10 + $0x8] sm:$0xff]
    %v357 = vadd.f32 %v339, %v340
    %v358 = vadd.f32 %v341, %v342
    %v359 = vadd.f32 %v355, %v357
    %v360 = vadd.f32 %v356, %v358
    %361 = vst [vmem:[#allocation10] sm:$0xff] %v359
    %362 = vst [vmem:[#allocation10 + $0x8] sm:$0xff] %v360
    %v363 = vld [vmem:[#allocation11] sm:$0xff]
    %v364 = vld [vmem:[#allocation11 + $0x8] sm:$0xff]
    %v365 = vlog2.pop %v339
    %v366 = vmul.f32 %v365, 0.6931472
    %v367 = vlog2.pop %v340
    %v368 = vmul.f32 %v367, 0.6931472
    %v369 = vlog2.pop %v341
    %v370 = vmul.f32 %v369, 0.6931472
    %v371 = vlog2.pop %v342
    %v372 = vmul.f32 %v371, 0.6931472
    %v373 = vmax.f32 %v366, -100.0
    %v374 = vmax.f32 %v368, -100.0
    %v375 = vmax.f32 %v370, -100.0
    %v376 = vmax.f32 %v372, -100.0
    %v377 = vsub.f32 1.0, %v339
    %v378 = vsub.f32 1.0, %v340
    %v379 = vsub.f32 1.0, %v341
    %v380 = vsub.f32 1.0, %v342
    %v381 = vlog2.pop %v377
    %v382 = vmul.f32 %v381, 0.6931472
    %v383 = vlog2.pop %v378
    %v384 = vmul.f32 %v383, 0.6931472
    %v385 = vlog2.pop %v379
    %v386 = vmul.f32 %v385, 0.6931472
    %v387 = vlog2.pop %v380
    %v388 = vmul.f32 %v387, 0.6931472
    %v389 = vmax.f32 %v382, -100.0
    %v390 = vmax.f32 %v384, -100.0
    %v391 = vmax.f32 %v386, -100.0
    %v392 = vmax.f32 %v388, -100.0
    %v393 = vsub.f32 %v373, %v389
    %v394 = vsub.f32 %v374, %v390
    %v395 = vsub.f32 %v375, %v391
    %v396 = vsub.f32 %v376, %v392
    %v397 = vmul.f32 %v327, %v393
    %v398 = vmul.f32 %v328, %v394
    %v399 = vmul.f32 %v329, %v395
    %v400 = vmul.f32 %v330, %v396
    %v401 = vadd.f32 %v397, %v389
    %v402 = vadd.f32 %v398, %v390
    %v403 = vadd.f32 %v399, %v391
    %v404 = vadd.f32 %v400, %v392
    %v405 = vsub.f32 0.0, %v401
    %v406 = vsub.f32 0.0, %v402
    %v407 = vsub.f32 0.0, %v403
    %v408 = vsub.f32 0.0, %v404
    %v409 = vadd.f32 %v405, %v406
    %v410 = vadd.f32 %v407, %v408
    %v411 = vadd.f32 %v363, %v409
    %v412 = vadd.f32 %v364, %v410
    %413 = vst [vmem:[#allocation11] sm:$0xff] %v411
    %414 = vst [vmem:[#allocation11 + $0x8] sm:$0xff] %v412
    %v415 = vld [vmem:[%s7] sm:$0xf]
    %v416 = vld [vmem:[%s7 + $0x4] sm:$0xf]
    %v417 = vld [vmem:[%s7 + $0x8] sm:$0xf]
    %v418 = vld [vmem:[%s7 + $0xc] sm:$0xf]
    %v419 = vunpack.c.l.bf16 %v415
    %v420 = vunpack.c.l.bf16 %v416
    %v421 = vunpack.c.l.bf16 %v417
    %v422 = vunpack.c.l.bf16 %v418
    %v423 = vld [vmem:[#allocation16] sm:$0xff]
    %v424 = vld [vmem:[#allocation16 + $0x8] sm:$0xff]
    %v425 = vadd.f32 %v419, %v420
    %v426 = vadd.f32 %v421, %v422
    %v427 = vadd.f32 %v423, %v425
    %v428 = vadd.f32 %v424, %v426
    %429 = vst [vmem:[#allocation16] sm:$0xff] %v427
    %430 = vst [vmem:[#allocation16 + $0x8] sm:$0xff] %v428
    %v431 = vld [vmem:[#allocation27] sm:$0xff]
    %v432 = vld [vmem:[#allocation27 + $0x8] sm:$0xff]
    %v433 = vld [vmem:[#allocation27 + $0x10] sm:$0xff]
    %v434 = vld [vmem:[#allocation27 + $0x18] sm:$0xff]
    %v435 = vld [vmem:[#allocation13] sm:$0xff]
    %v436 = vld [vmem:[#allocation13 + $0x8] sm:$0xff]
    %v437 = vmul.f32 %v431, %v419
    %v438 = vmul.f32 %v432, %v420
    %v439 = vmul.f32 %v433, %v421
    %v440 = vmul.f32 %v434, %v422
    %v441 = vadd.f32 %v437, %v438
    %v442 = vadd.f32 %v439, %v440
    %v443 = vadd.f32 %v435, %v441
    %v444 = vadd.f32 %v436, %v442
    %445 = vst [vmem:[#allocation13] sm:$0xff] %v443
    %446 = vst [vmem:[#allocation13 + $0x8] sm:$0xff] %v444
    %v447 = vld [vmem:[#allocation14] sm:$0xff]
    %v448 = vld [vmem:[#allocation14 + $0x8] sm:$0xff]
    %v449 = vadd.f32 %v431, %v432
    %v450 = vadd.f32 %v433, %v434
    %v451 = vadd.f32 %v447, %v449
    %v452 = vadd.f32 %v448, %v450
    %453 = vst [vmem:[#allocation14] sm:$0xff] %v451
    %454 = vst [vmem:[#allocation14 + $0x8] sm:$0xff] %v452
    %v455 = vld [vmem:[#allocation15] sm:$0xff]
    %v456 = vld [vmem:[#allocation15 + $0x8] sm:$0xff]
    %v457 = vlog2.pop %v431
    %v458 = vmul.f32 %v457, 0.6931472
    %v459 = vlog2.pop %v432
    %v460 = vmul.f32 %v459, 0.6931472
    %v461 = vlog2.pop %v433
    %v462 = vmul.f32 %v461, 0.6931472
    %v463 = vlog2.pop %v434
    %v464 = vmul.f32 %v463, 0.6931472
    %v465 = vmax.f32 %v458, -100.0
    %v466 = vmax.f32 %v460, -100.0
    %v467 = vmax.f32 %v462, -100.0
    %v468 = vmax.f32 %v464, -100.0
    %v469 = vsub.f32 1.0, %v431
    %v470 = vsub.f32 1.0, %v432
    %v471 = vsub.f32 1.0, %v433
    %v472 = vsub.f32 1.0, %v434
    %v473 = vlog2.pop %v469
    %v474 = vmul.f32 %v473, 0.6931472
    %v475 = vlog2.pop %v470
    %v476 = vmul.f32 %v475, 0.6931472
    %v477 = vlog2.pop %v471
    %v478 = vmul.f32 %v477, 0.6931472
    %v479 = vlog2.pop %v472
    %v480 = vmul.f32 %v479, 0.6931472
    %v481 = vmax.f32 %v474, -100.0
    %v482 = vmax.f32 %v476, -100.0
    %v483 = vmax.f32 %v478, -100.0
    %v484 = vmax.f32 %v480, -100.0
    %v485 = vsub.f32 %v465, %v481
    %v486 = vsub.f32 %v466, %v482
    %v487 = vsub.f32 %v467, %v483
    %v488 = vsub.f32 %v468, %v484
    %v489 = vmul.f32 %v419, %v485
    %v490 = vmul.f32 %v420, %v486
    %v491 = vmul.f32 %v421, %v487
    %v492 = vmul.f32 %v422, %v488
    %v493 = vadd.f32 %v489, %v481
    %v494 = vadd.f32 %v490, %v482
    %v495 = vadd.f32 %v491, %v483
    %v496 = vadd.f32 %v492, %v484
    %v497 = vsub.f32 0.0, %v493
    %v498 = vsub.f32 0.0, %v494
    %v499 = vsub.f32 0.0, %v495
    %v500 = vsub.f32 0.0, %v496
    %v501 = vadd.f32 %v497, %v498
    %v502 = vadd.f32 %v499, %v500
    %v503 = vadd.f32 %v455, %v501
    %v504 = vadd.f32 %v456, %v502
    %505 = vst [vmem:[#allocation15] sm:$0xff] %v503
    %506 = vst [vmem:[#allocation15 + $0x8] sm:$0xff] %v504
    // Predicated region
    $region78: #{tpu_custom_call.1} parent=1 // pred_check
      %p507 = pneg %p121
    $region79: #{tpu_custom_call.1} parent=1 // pred_check_branch
      %509 = sbr.rel (%p507) target = $region81
    $region80: #{tpu_custom_call.1} parent=1 // pred_region
      %s510 = sld [smem:[#allocation17]]
      %s511 = sld [smem:[#allocation17 + $0x1]]
      %v512 = vld [vmem:[#allocation8] sm:$0xff]
      %v513 = vld [vmem:[#allocation8 + $0x8] sm:$0xff]
      %514 = vadd.xlane.f32.xlu0 %v512
      %v515 = vpop.xlane.xlu0 %514
      %516 = vadd.xlane.f32.xlu0 %v513
      %v517 = vpop.xlane.xlu0 %516
      %v520 = vlaneseq
      %v521 = vand.u32 %v520, 127
      %v522 = vlaneseq
      %v523 = vshrl.u32 %v522, 7
      %v524 = vsub.s32 %v521, %v523
      %v525 = vrot.slane %v515, %v524
      %v526 = vlaneseq
      %v527 = vshrl.u32 %v526, 7
      %v528 = vsub.s32 %v521, %v527
      %v529 = vrot.slane %v517, %v528
      %vm530 = vcmask 1041409
      %v531 = vsel %vm530, %v529, %v525
      %vm533 = vcmask 58368
      %v534 = vsel %vm533, %v531, 0.0
      %535 = vadd.xlane.f32.xlu0 %v534
      %v536 = vpop.xlane.xlu0 %535
      %v537 = vld [vmem:[#allocation4] sm:$0xff]
      %v538 = vld [vmem:[#allocation4 + $0x8] sm:$0xff]
      %539 = vadd.xlane.f32.xlu0 %v537
      %v540 = vpop.xlane.xlu0 %539
      %541 = vadd.xlane.f32.xlu0 %v538
      %v542 = vpop.xlane.xlu0 %541
      %v545 = vlaneseq
      %v546 = vshrl.u32 %v545, 7
      %v547 = vsub.s32 %v521, %v546
      %v548 = vrot.slane %v540, %v547
      %v549 = vlaneseq
      %v550 = vshrl.u32 %v549, 7
      %v551 = vsub.s32 %v521, %v550
      %v552 = vrot.slane %v542, %v551
      %v553 = vsel %vm530, %v552, %v548
      %v555 = vsel %vm533, %v553, 0.0
      %556 = vadd.xlane.f32.xlu0 %v555
      %v557 = vpop.xlane.xlu0 %556
      %v558 = vld [vmem:[#allocation2] sm:$0xff]
      %v559 = vld [vmem:[#allocation2 + $0x8] sm:$0xff]
      %560 = vadd.xlane.f32.xlu0 %v558
      %v561 = vpop.xlane.xlu0 %560
      %562 = vadd.xlane.f32.xlu0 %v559
      %v563 = vpop.xlane.xlu0 %562
      %v566 = vlaneseq
      %v567 = vshrl.u32 %v566, 7
      %v568 = vsub.s32 %v521, %v567
      %v569 = vrot.slane %v561, %v568
      %v570 = vlaneseq
      %v571 = vshrl.u32 %v570, 7
      %v572 = vsub.s32 %v521, %v571
      %v573 = vrot.slane %v563, %v572
      %v574 = vsel %vm530, %v573, %v569
      %v576 = vsel %vm533, %v574, 0.0
      %577 = vadd.xlane.f32.xlu0 %v576
      %v578 = vpop.xlane.xlu0 %577
      %v579 = vld [vmem:[#allocation3] sm:$0xff]
      %v580 = vld [vmem:[#allocation3 + $0x8] sm:$0xff]
      %581 = vadd.xlane.f32.xlu0 %v579
      %v582 = vpop.xlane.xlu0 %581
      %583 = vadd.xlane.f32.xlu0 %v580
      %v584 = vpop.xlane.xlu0 %583
      %v587 = vlaneseq
      %v588 = vshrl.u32 %v587, 7
      %v589 = vsub.s32 %v521, %v588
      %v590 = vrot.slane %v582, %v589
      %v591 = vlaneseq
      %v592 = vshrl.u32 %v591, 7
      %v593 = vsub.s32 %v521, %v592
      %v594 = vrot.slane %v584, %v593
      %v595 = vsel %vm530, %v594, %v590
      %v597 = vsel %vm533, %v595, 0.0
      %598 = vadd.xlane.f32.xlu0 %v597
      %v599 = vpop.xlane.xlu0 %598
      %vm600 = vcmask 1024
      %v601 = vsel %vm600, %v557, 0.0
      %602 = vadd.xlane.f32.xlu0 %v601
      %v603 = vpop.xlane.xlu0 %602
      %v604 = vrot.slane %v603, 4
      %v605 = vadd.f32 %v603, %v604
      %v606 = vrot.slane %v605, 2
      %v607 = vadd.f32 %v605, %v606
      %v608 = vrot.slane %v607, 1
      %v609 = vadd.f32 %v607, %v608
      %s610 = vtos %v609
      %s611 = smul.f32 %s610, 0.00048828125
      %v612 = vmul.f32 %v578, 2.0
      %v613 = vadd.f32 %v612, 1.0
      %v614 = vadd.f32 %v599, %v536
      %v615 = vadd.f32 %v614, 1.0
      %v616 = vrcp.pop %v615
      %v617 = vmul.f32 %v613, %v616
      %v618 = vsel %vm600, %v617, 0.0
      %619 = vadd.xlane.f32.xlu0 %v618
      %v620 = vpop.xlane.xlu0 %619
      %v621 = vrot.slane %v620, 4
      %v622 = vadd.f32 %v620, %v621
      %v623 = vrot.slane %v622, 2
      %v624 = vadd.f32 %v622, %v623
      %v625 = vrot.slane %v624, 1
      %v626 = vadd.f32 %v624, %v625
      %s627 = vtos %v626
      %s628 = smul.f32 %s627, 0.5
      %s629 = ssub.f32 1.0, %s628
      %s630 = smul.f32 %s511, %s629
      %s631 = smul.f32 %s510, %s611
      %s632 = sadd.f32 %s630, %s631
      %v633 = vld [vmem:[#allocation7] sm:$0xff]
      %v634 = vld [vmem:[#allocation7 + $0x8] sm:$0xff]
      %635 = vadd.xlane.f32.xlu0 %v633
      %v636 = vpop.xlane.xlu0 %635
      %637 = vadd.xlane.f32.xlu0 %v634
      %v638 = vpop.xlane.xlu0 %637
      %v641 = vlaneseq
      %v642 = vshrl.u32 %v641, 7
      %v643 = vsub.s32 %v521, %v642
      %v644 = vrot.slane %v636, %v643
      %v645 = vlaneseq
      %v646 = vshrl.u32 %v645, 7
      %v647 = vsub.s32 %v521, %v646
      %v648 = vrot.slane %v638, %v647
      %v649 = vsel %vm530, %v648, %v644
      %v651 = vsel %vm533, %v649, 0.0
      %652 = vadd.xlane.f32.xlu0 %v651
      %v653 = vpop.xlane.xlu0 %652
      %v654 = vld [vmem:[#allocation5] sm:$0xff]
      %v655 = vld [vmem:[#allocation5 + $0x8] sm:$0xff]
      %656 = vadd.xlane.f32.xlu0 %v654
      %v657 = vpop.xlane.xlu0 %656
      %658 = vadd.xlane.f32.xlu0 %v655
      %v659 = vpop.xlane.xlu0 %658
      %v662 = vlaneseq
      %v663 = vshrl.u32 %v662, 7
      %v664 = vsub.s32 %v521, %v663
      %v665 = vrot.slane %v657, %v664
      %v666 = vlaneseq
      %v667 = vshrl.u32 %v666, 7
      %v668 = vsub.s32 %v521, %v667
      %v669 = vrot.slane %v659, %v668
      %v670 = vsel %vm530, %v669, %v665
      %v672 = vsel %vm533, %v670, 0.0
      %673 = vadd.xlane.f32.xlu0 %v672
      %v674 = vpop.xlane.xlu0 %673
      %v675 = vld [vmem:[#allocation6] sm:$0xff]
      %v676 = vld [vmem:[#allocation6 + $0x8] sm:$0xff]
      %677 = vadd.xlane.f32.xlu0 %v675
      %v678 = vpop.xlane.xlu0 %677
      %679 = vadd.xlane.f32.xlu0 %v676
      %v680 = vpop.xlane.xlu0 %679
      %v683 = vlaneseq
      %v684 = vshrl.u32 %v683, 7
      %v685 = vsub.s32 %v521, %v684
      %v686 = vrot.slane %v678, %v685
      %v687 = vlaneseq
      %v688 = vshrl.u32 %v687, 7
      %v689 = vsub.s32 %v521, %v688
      %v690 = vrot.slane %v680, %v689
      %v691 = vsel %vm530, %v690, %v686
      %v693 = vsel %vm533, %v691, 0.0
      %694 = vadd.xlane.f32.xlu0 %v693
      %v695 = vpop.xlane.xlu0 %694
      %v696 = vsel %vm600, %v653, 0.0
      %697 = vadd.xlane.f32.xlu0 %v696
      %v698 = vpop.xlane.xlu0 %697
      %v699 = vrot.slane %v698, 4
      %v700 = vadd.f32 %v698, %v699
      %v701 = vrot.slane %v700, 2
      %v702 = vadd.f32 %v700, %v701
      %v703 = vrot.slane %v702, 1
      %v704 = vadd.f32 %v702, %v703
      %s705 = vtos %v704
      %s706 = smul.f32 %s705, 0.00048828125
      %v707 = vmul.f32 %v674, 2.0
      %v708 = vadd.f32 %v707, 1.0
      %v709 = vadd.f32 %v695, %v536
      %v710 = vadd.f32 %v709, 1.0
      %v711 = vrcp.pop %v710
      %v712 = vmul.f32 %v708, %v711
      %v713 = vsel %vm600, %v712, 0.0
      %714 = vadd.xlane.f32.xlu0 %v713
      %v715 = vpop.xlane.xlu0 %714
      %v716 = vrot.slane %v715, 4
      %v717 = vadd.f32 %v715, %v716
      %v718 = vrot.slane %v717, 2
      %v719 = vadd.f32 %v717, %v718
      %v720 = vrot.slane %v719, 1
      %v721 = vadd.f32 %v719, %v720
      %s722 = vtos %v721
      %s723 = smul.f32 %s722, 0.5
      %s724 = ssub.f32 1.0, %s723
      %s725 = smul.f32 %s511, %s724
      %s726 = smul.f32 %s510, %s706
      %s727 = sadd.f32 %s725, %s726
      %s728 = smul.f32 %s727, 0.5
      %s729 = sadd.f32 %s632, %s728
      %v730 = vld [vmem:[#allocation11] sm:$0xff]
      %v731 = vld [vmem:[#allocation11 + $0x8] sm:$0xff]
      %732 = vadd.xlane.f32.xlu0 %v730
      %v733 = vpop.xlane.xlu0 %732
      %734 = vadd.xlane.f32.xlu0 %v731
      %v735 = vpop.xlane.xlu0 %734
      %v738 = vlaneseq
      %v739 = vshrl.u32 %v738, 7
      %v740 = vsub.s32 %v521, %v739
      %v741 = vrot.slane %v733, %v740
      %v742 = vlaneseq
      %v743 = vshrl.u32 %v742, 7
      %v744 = vsub.s32 %v521, %v743
      %v745 = vrot.slane %v735, %v744
      %v746 = vsel %vm530, %v745, %v741
      %v748 = vsel %vm533, %v746, 0.0
      %749 = vadd.xlane.f32.xlu0 %v748
      %v750 = vpop.xlane.xlu0 %749
      %v751 = vld [vmem:[#allocation9] sm:$0xff]
      %v752 = vld [vmem:[#allocation9 + $0x8] sm:$0xff]
      %753 = vadd.xlane.f32.xlu0 %v751
      %v754 = vpop.xlane.xlu0 %753
      %755 = vadd.xlane.f32.xlu0 %v752
      %v756 = vpop.xlane.xlu0 %755
      %v759 = vlaneseq
      %v760 = vshrl.u32 %v759, 7
      %v761 = vsub.s32 %v521, %v760
      %v762 = vrot.slane %v754, %v761
      %v763 = vlaneseq
      %v764 = vshrl.u32 %v763, 7
      %v765 = vsub.s32 %v521, %v764
      %v766 = vrot.slane %v756, %v765
      %v767 = vsel %vm530, %v766, %v762
      %v769 = vsel %vm533, %v767, 0.0
      %770 = vadd.xlane.f32.xlu0 %v769
      %v771 = vpop.xlane.xlu0 %770
      %v772 = vld [vmem:[#allocation10] sm:$0xff]
      %v773 = vld [vmem:[#allocation10 + $0x8] sm:$0xff]
      %774 = vadd.xlane.f32.xlu0 %v772
      %v775 = vpop.xlane.xlu0 %774
      %776 = vadd.xlane.f32.xlu0 %v773
      %v777 = vpop.xlane.xlu0 %776
      %v780 = vlaneseq
      %v781 = vshrl.u32 %v780, 7
      %v782 = vsub.s32 %v521, %v781
      %v783 = vrot.slane %v775, %v782
      %v784 = vlaneseq
      %v785 = vshrl.u32 %v784, 7
      %v786 = vsub.s32 %v521, %v785
      %v787 = vrot.slane %v777, %v786
      %v788 = vsel %vm530, %v787, %v783
      %v790 = vsel %vm533, %v788, 0.0
      %791 = vadd.xlane.f32.xlu0 %v790
      %v792 = vpop.xlane.xlu0 %791
      %v793 = vld [vmem:[#allocation12] sm:$0xff]
      %v794 = vld [vmem:[#allocation12 + $0x8] sm:$0xff]
      %795 = vadd.xlane.f32.xlu0 %v793
      %v796 = vpop.xlane.xlu0 %795
      %797 = vadd.xlane.f32.xlu0 %v794
      %v798 = vpop.xlane.xlu0 %797
      %v801 = vlaneseq
      %v802 = vshrl.u32 %v801, 7
      %v803 = vsub.s32 %v521, %v802
      %v804 = vrot.slane %v796, %v803
      %v805 = vlaneseq
      %v806 = vshrl.u32 %v805, 7
      %v807 = vsub.s32 %v521, %v806
      %v808 = vrot.slane %v798, %v807
      %v809 = vsel %vm530, %v808, %v804
      %v811 = vsel %vm533, %v809, 0.0
      %812 = vadd.xlane.f32.xlu0 %v811
      %v813 = vpop.xlane.xlu0 %812
      %v814 = vsel %vm600, %v750, 0.0
      %815 = vadd.xlane.f32.xlu0 %v814
      %v816 = vpop.xlane.xlu0 %815
      %v817 = vrot.slane %v816, 4
      %v818 = vadd.f32 %v816, %v817
      %v819 = vrot.slane %v818, 2
      %v820 = vadd.f32 %v818, %v819
      %v821 = vrot.slane %v820, 1
      %v822 = vadd.f32 %v820, %v821
      %s823 = vtos %v822
      %s824 = smul.f32 %s823, 0.001953125
      %v825 = vmul.f32 %v771, 2.0
      %v826 = vadd.f32 %v825, 1.0
      %v827 = vadd.f32 %v792, %v813
      %v828 = vadd.f32 %v827, 1.0
      %v829 = vrcp.pop %v828
      %v830 = vmul.f32 %v826, %v829
      %v831 = vsel %vm600, %v830, 0.0
      %832 = vadd.xlane.f32.xlu0 %v831
      %v833 = vpop.xlane.xlu0 %832
      %v834 = vrot.slane %v833, 4
      %v835 = vadd.f32 %v833, %v834
      %v836 = vrot.slane %v835, 2
      %v837 = vadd.f32 %v835, %v836
      %v838 = vrot.slane %v837, 1
      %v839 = vadd.f32 %v837, %v838
      %s840 = vtos %v839
      %s841 = smul.f32 %s840, 0.5
      %s842 = ssub.f32 1.0, %s841
      %s843 = smul.f32 %s511, %s842
      %s844 = smul.f32 %s510, %s824
      %s845 = sadd.f32 %s843, %s844
      %s846 = smul.f32 %s845, 0.4
      %s847 = sadd.f32 %s729, %s846
      %v848 = vld [vmem:[#allocation15] sm:$0xff]
      %v849 = vld [vmem:[#allocation15 + $0x8] sm:$0xff]
      %850 = vadd.xlane.f32.xlu0 %v848
      %v851 = vpop.xlane.xlu0 %850
      %852 = vadd.xlane.f32.xlu0 %v849
      %v853 = vpop.xlane.xlu0 %852
      %v856 = vlaneseq
      %v857 = vshrl.u32 %v856, 7
      %v858 = vsub.s32 %v521, %v857
      %v859 = vrot.slane %v851, %v858
      %v860 = vlaneseq
      %v861 = vshrl.u32 %v860, 7
      %v862 = vsub.s32 %v521, %v861
      %v863 = vrot.slane %v853, %v862
      %v864 = vsel %vm530, %v863, %v859
      %v866 = vsel %vm533, %v864, 0.0
      %867 = vadd.xlane.f32.xlu0 %v866
      %v868 = vpop.xlane.xlu0 %867
      %v869 = vld [vmem:[#allocation13] sm:$0xff]
      %v870 = vld [vmem:[#allocation13 + $0x8] sm:$0xff]
      %871 = vadd.xlane.f32.xlu0 %v869
      %v872 = vpop.xlane.xlu0 %871
      %873 = vadd.xlane.f32.xlu0 %v870
      %v874 = vpop.xlane.xlu0 %873
      %v877 = vlaneseq
      %v878 = vshrl.u32 %v877, 7
      %v879 = vsub.s32 %v521, %v878
      %v880 = vrot.slane %v872, %v879
      %v881 = vlaneseq
      %v882 = vshrl.u32 %v881, 7
      %v883 = vsub.s32 %v521, %v882
      %v884 = vrot.slane %v874, %v883
      %v885 = vsel %vm530, %v884, %v880
      %v887 = vsel %vm533, %v885, 0.0
      %888 = vadd.xlane.f32.xlu0 %v887
      %v889 = vpop.xlane.xlu0 %888
      %v890 = vld [vmem:[#allocation14] sm:$0xff]
      %v891 = vld [vmem:[#allocation14 + $0x8] sm:$0xff]
      %892 = vadd.xlane.f32.xlu0 %v890
      %v893 = vpop.xlane.xlu0 %892
      %894 = vadd.xlane.f32.xlu0 %v891
      %v895 = vpop.xlane.xlu0 %894
      %v898 = vlaneseq
      %v899 = vshrl.u32 %v898, 7
      %v900 = vsub.s32 %v521, %v899
      %v901 = vrot.slane %v893, %v900
      %v902 = vlaneseq
      %v903 = vshrl.u32 %v902, 7
      %v904 = vsub.s32 %v521, %v903
      %v905 = vrot.slane %v895, %v904
      %v906 = vsel %vm530, %v905, %v901
      %v908 = vsel %vm533, %v906, 0.0
      %909 = vadd.xlane.f32.xlu0 %v908
      %v910 = vpop.xlane.xlu0 %909
      %v911 = vld [vmem:[#allocation16] sm:$0xff]
      %v912 = vld [vmem:[#allocation16 + $0x8] sm:$0xff]
      %913 = vadd.xlane.f32.xlu0 %v911
      %v914 = vpop.xlane.xlu0 %913
      %915 = vadd.xlane.f32.xlu0 %v912
      %v916 = vpop.xlane.xlu0 %915
      %v919 = vlaneseq
      %v920 = vshrl.u32 %v919, 7
      %v921 = vsub.s32 %v521, %v920
      %v922 = vrot.slane %v914, %v921
      %v923 = vlaneseq
      %v924 = vshrl.u32 %v923, 7
      %v925 = vsub.s32 %v521, %v924
      %v926 = vrot.slane %v916, %v925
      %v927 = vsel %vm530, %v926, %v922
      %v929 = vsel %vm533, %v927, 0.0
      %930 = vadd.xlane.f32.xlu0 %v929
      %v931 = vpop.xlane.xlu0 %930
      %v932 = vsel %vm600, %v868, 0.0
      %933 = vadd.xlane.f32.xlu0 %v932
      %v934 = vpop.xlane.xlu0 %933
      %v935 = vrot.slane %v934, 4
      %v936 = vadd.f32 %v934, %v935
      %v937 = vrot.slane %v936, 2
      %v938 = vadd.f32 %v936, %v937
      %v939 = vrot.slane %v938, 1
      %v940 = vadd.f32 %v938, %v939
      %s941 = vtos %v940
      %s942 = smul.f32 %s941, 0.0078125
      %v943 = vmul.f32 %v889, 2.0
      %v944 = vadd.f32 %v943, 1.0
      %v945 = vadd.f32 %v910, %v931
      %v946 = vadd.f32 %v945, 1.0
      %v947 = vrcp.pop %v946
      %v948 = vmul.f32 %v944, %v947
      %v949 = vsel %vm600, %v948, 0.0
      %950 = vadd.xlane.f32.xlu0 %v949
      %v951 = vpop.xlane.xlu0 %950
      %v952 = vrot.slane %v951, 4
      %v953 = vadd.f32 %v951, %v952
      %v954 = vrot.slane %v953, 2
      %v955 = vadd.f32 %v953, %v954
      %v956 = vrot.slane %v955, 1
      %v957 = vadd.f32 %v955, %v956
      %s958 = vtos %v957
      %s959 = smul.f32 %s958, 0.5
      %s960 = ssub.f32 1.0, %s959
      %s961 = smul.f32 %s511, %s960
      %s962 = smul.f32 %s510, %s942
      %s963 = sadd.f32 %s961, %s962
      %s964 = smul.f32 %s963, 0.3
      %s965 = sadd.f32 %s847, %s964
      %v966 = vld [vmem:[%s8] sm:$0x1]
      %v967 = vld [vmem:[%s8 + $0x1] sm:$0x1]
      %v968 = vld [vmem:[%s9] sm:$0x1]
      %v969 = vld [vmem:[%s9 + $0x1] sm:$0x1]
      %v970 = vunpack.c.l.bf16 %v968
      %v971 = vunpack.c.l.bf16 %v969
      %v972 = vlog2.pop %v966
      %v973 = vmul.f32 %v972, 0.6931472
      %v974 = vlog2.pop %v967
      %v975 = vmul.f32 %v974, 0.6931472
      %v976 = vmax.f32 %v973, -100.0
      %v977 = vmax.f32 %v975, -100.0
      %v978 = vsub.f32 1.0, %v966
      %v979 = vsub.f32 1.0, %v967
      %v980 = vlog2.pop %v978
      %v981 = vmul.f32 %v980, 0.6931472
      %v982 = vlog2.pop %v979
      %v983 = vmul.f32 %v982, 0.6931472
      %v984 = vmax.f32 %v981, -100.0
      %v985 = vmax.f32 %v983, -100.0
      %v986 = vsub.f32 %v976, %v984
      %v987 = vsub.f32 %v977, %v985
      %v988 = vmul.f32 %v970, %v986
      %v989 = vmul.f32 %v971, %v987
      %v990 = vadd.f32 %v988, %v984
      %v991 = vadd.f32 %v989, %v985
      %v992 = vsub.f32 0.0, %v990
      %v993 = vsub.f32 0.0, %v991
      %vm994 = vcmask 1040384
      %v995 = vsel %vm994, %v992, 0.0
      %996 = vadd.xlane.f32.xlu0 %v995
      %v997 = vpop.xlane.xlu0 %996
      %v998 = vsel %vm994, %v993, 0.0
      %999 = vadd.xlane.f32.xlu0 %v998
      %v1000 = vpop.xlane.xlu0 %999
      %v1001 = vadd.f32 %v997, 0.0
      %v1002 = vadd.f32 %v1000, 0.0
      %v1003 = vmul.f32 %v966, %v970
      %v1004 = vmul.f32 %v967, %v971
      %v1005 = vsel %vm994, %v1003, 0.0
      %1006 = vadd.xlane.f32.xlu0 %v1005
      %v1007 = vpop.xlane.xlu0 %1006
      %v1008 = vsel %vm994, %v1004, 0.0
      %1009 = vadd.xlane.f32.xlu0 %v1008
      %v1010 = vpop.xlane.xlu0 %1009
      %v1011 = vadd.f32 %v1007, 0.0
      %v1012 = vadd.f32 %v1010, 0.0
      %v1013 = vsel %vm994, %v966, 0.0
      %1014 = vadd.xlane.f32.xlu0 %v1013
      %v1015 = vpop.xlane.xlu0 %1014
      %v1016 = vsel %vm994, %v967, 0.0
      %1017 = vadd.xlane.f32.xlu0 %v1016
      %v1018 = vpop.xlane.xlu0 %1017
      %v1019 = vadd.f32 %v1015, 0.0
      %v1020 = vadd.f32 %v1018, 0.0
      %v1021 = vsel %vm994, %v970, 0.0
      %1022 = vadd.xlane.f32.xlu0 %v1021
      %v1023 = vpop.xlane.xlu0 %1022
      %v1024 = vsel %vm994, %v971, 0.0
      %1025 = vadd.xlane.f32.xlu0 %v1024
      %v1026 = vpop.xlane.xlu0 %1025
      %v1027 = vadd.f32 %v1023, 0.0
      %v1028 = vadd.f32 %v1026, 0.0
      %v1031 = vrot.slane %v1002, 7
      %v1032 = vsel %vm530, %v1031, %v1001
      %v1034 = vsel %vm600, %v1032, 0.0
      %1035 = vadd.xlane.f32.xlu0 %v1034
      %v1036 = vpop.xlane.xlu0 %1035
      %v1037 = vrot.slane %v1036, 4
      %v1038 = vadd.f32 %v1036, %v1037
      %v1039 = vrot.slane %v1038, 2
      %v1040 = vadd.f32 %v1038, %v1039
      %v1041 = vrot.slane %v1040, 1
      %v1042 = vadd.f32 %v1040, %v1041
      %s1043 = vtos %v1042
      %s1044 = smul.f32 %s1043, 0.03125
      %v1045 = vmul.f32 %v1011, 2.0
      %v1046 = vmul.f32 %v1012, 2.0
      %v1047 = vadd.f32 %v1045, 1.0
      %v1048 = vadd.f32 %v1046, 1.0
      %v1049 = vadd.f32 %v1019, %v1027
      %v1050 = vadd.f32 %v1020, %v1028
      %v1051 = vadd.f32 %v1049, 1.0
      %v1052 = vadd.f32 %v1050, 1.0
      %v1053 = vrcp.pop %v1051
      %v1054 = vmul.f32 %v1047, %v1053
      %v1055 = vrcp.pop %v1052
      %v1056 = vmul.f32 %v1048, %v1055
      %v1059 = vrot.slane %v1056, 7
      %v1060 = vsel %vm530, %v1059, %v1054
      %v1062 = vsel %vm600, %v1060, 0.0
      %1063 = vadd.xlane.f32.xlu0 %v1062
      %v1064 = vpop.xlane.xlu0 %1063
      %v1065 = vrot.slane %v1064, 4
      %v1066 = vadd.f32 %v1064, %v1065
      %v1067 = vrot.slane %v1066, 2
      %v1068 = vadd.f32 %v1066, %v1067
      %v1069 = vrot.slane %v1068, 1
      %v1070 = vadd.f32 %v1068, %v1069
      %s1071 = vtos %v1070
      %s1072 = smul.f32 %s1071, 0.5
      %s1073 = ssub.f32 1.0, %s1072
      %s1074 = smul.f32 %s511, %s1073
      %s1075 = smul.f32 %s510, %s1044
      %s1076 = sadd.f32 %s1074, %s1075
      %s1077 = smul.f32 %s1076, 0.2
      %s1078 = sadd.f32 %s965, %s1077
      %v1079 = vld [vmem:[%s10] sm:$0x1]
      %v1080 = vld [vmem:[%s10 + $0x1] sm:$0x1]
      %v1081 = vld [vmem:[%s11] sm:$0x1]
      %v1082 = vld [vmem:[%s11 + $0x1] sm:$0x1]
      %v1083 = vunpack.c.l.bf16 %v1081
      %v1084 = vunpack.c.l.bf16 %v1082
      %v1085 = vlog2.pop %v1079
      %v1086 = vmul.f32 %v1085, 0.6931472
      %v1087 = vlog2.pop %v1080
      %v1088 = vmul.f32 %v1087, 0.6931472
      %v1089 = vmax.f32 %v1086, -100.0
      %v1090 = vmax.f32 %v1088, -100.0
      %v1091 = vsub.f32 1.0, %v1079
      %v1092 = vsub.f32 1.0, %v1080
      %v1093 = vlog2.pop %v1091
      %v1094 = vmul.f32 %v1093, 0.6931472
      %v1095 = vlog2.pop %v1092
      %v1096 = vmul.f32 %v1095, 0.6931472
      %v1097 = vmax.f32 %v1094, -100.0
      %v1098 = vmax.f32 %v1096, -100.0
      %v1099 = vsub.f32 %v1089, %v1097
      %v1100 = vsub.f32 %v1090, %v1098
      %v1101 = vmul.f32 %v1083, %v1099
      %v1102 = vmul.f32 %v1084, %v1100
      %v1103 = vadd.f32 %v1101, %v1097
      %v1104 = vadd.f32 %v1102, %v1098
      %v1105 = vsub.f32 0.0, %v1103
      %v1106 = vsub.f32 0.0, %v1104
      %v1107 = vsel %vm994, %v1105, 0.0
      %1108 = vadd.xlane.f32.xlu0 %v1107
      %v1109 = vpop.xlane.xlu0 %1108
      %v1110 = vsel %vm994, %v1106, 0.0
      %1111 = vadd.xlane.f32.xlu0 %v1110
      %v1112 = vpop.xlane.xlu0 %1111
      %v1113 = vadd.f32 %v1109, 0.0
      %v1114 = vadd.f32 %v1112, 0.0
      %v1115 = vmul.f32 %v1079, %v1083
      %v1116 = vmul.f32 %v1080, %v1084
      %v1117 = vsel %vm994, %v1115, 0.0
      %1118 = vadd.xlane.f32.xlu0 %v1117
      %v1119 = vpop.xlane.xlu0 %1118
      %v1120 = vsel %vm994, %v1116, 0.0
      %1121 = vadd.xlane.f32.xlu0 %v1120
      %v1122 = vpop.xlane.xlu0 %1121
      %v1123 = vadd.f32 %v1119, 0.0
      %v1124 = vadd.f32 %v1122, 0.0
      %v1125 = vsel %vm994, %v1079, 0.0
      %1126 = vadd.xlane.f32.xlu0 %v1125
      %v1127 = vpop.xlane.xlu0 %1126
      %v1128 = vsel %vm994, %v1080, 0.0
      %1129 = vadd.xlane.f32.xlu0 %v1128
      %v1130 = vpop.xlane.xlu0 %1129
      %v1131 = vadd.f32 %v1127, 0.0
      %v1132 = vadd.f32 %v1130, 0.0
      %v1133 = vsel %vm994, %v1083, 0.0
      %1134 = vadd.xlane.f32.xlu0 %v1133
      %v1135 = vpop.xlane.xlu0 %1134
      %v1136 = vsel %vm994, %v1084, 0.0
      %1137 = vadd.xlane.f32.xlu0 %v1136
      %v1138 = vpop.xlane.xlu0 %1137
      %v1139 = vadd.f32 %v1135, 0.0
      %v1140 = vadd.f32 %v1138, 0.0
      %v1143 = vrot.slane %v1114, 7
      %v1144 = vsel %vm530, %v1143, %v1113
      %v1146 = vsel %vm600, %v1144, 0.0
      %1147 = vadd.xlane.f32.xlu0 %v1146
      %v1148 = vpop.xlane.xlu0 %1147
      %v1149 = vrot.slane %v1148, 4
      %v1150 = vadd.f32 %v1148, %v1149
      %v1151 = vrot.slane %v1150, 2
      %v1152 = vadd.f32 %v1150, %v1151
      %v1153 = vrot.slane %v1152, 1
      %v1154 = vadd.f32 %v1152, %v1153
      %s1155 = vtos %v1154
      %s1156 = smul.f32 %s1155, 0.125
      %v1157 = vmul.f32 %v1123, 2.0
      %v1158 = vmul.f32 %v1124, 2.0
      %v1159 = vadd.f32 %v1157, 1.0
      %v1160 = vadd.f32 %v1158, 1.0
      %v1161 = vadd.f32 %v1131, %v1139
      %v1162 = vadd.f32 %v1132, %v1140
      %v1163 = vadd.f32 %v1161, 1.0
      %v1164 = vadd.f32 %v1162, 1.0
      %v1165 = vrcp.pop %v1163
      %v1166 = vmul.f32 %v1159, %v1165
      %v1167 = vrcp.pop %v1164
      %v1168 = vmul.f32 %v1160, %v1167
      %v1171 = vrot.slane %v1168, 7
      %v1172 = vsel %vm530, %v1171, %v1166
      %v1174 = vsel %vm600, %v1172, 0.0
      %1175 = vadd.xlane.f32.xlu0 %v1174
      %v1176 = vpop.xlane.xlu0 %1175
      %v1177 = vrot.slane %v1176, 4
      %v1178 = vadd.f32 %v1176, %v1177
      %v1179 = vrot.slane %v1178, 2
      %v1180 = vadd.f32 %v1178, %v1179
      %v1181 = vrot.slane %v1180, 1
      %v1182 = vadd.f32 %v1180, %v1181
      %s1183 = vtos %v1182
      %s1184 = smul.f32 %s1183, 0.5
      %s1185 = ssub.f32 1.0, %s1184
      %s1186 = smul.f32 %s511, %s1185
      %s1187 = smul.f32 %s510, %s1156
      %s1188 = sadd.f32 %s1186, %s1187
      %s1189 = smul.f32 %s1188, 0.1
      %s1190 = sadd.f32 %s1078, %s1189
      %s1191 = scalar_lea.smem [#allocation28], 0
      %1192 = sst [smem:[%s1191]] %s1190
    $region81: #{tpu_custom_call.1} parent=1 // pred_fallthru
      _
    // Predicated region
    $region82: #{tpu_custom_call.1} parent=1 // pred_check
      _
    $region83: #{tpu_custom_call.1} parent=1 // pred_check_branch
      %1194 = sbr.rel (0) target = $region85
    $region84: #{tpu_custom_call.1} parent=1 // pred_region
      %s1196 = ssub.s32 16, 16
      %1197 = vsyncadd [#allocation20], %s1196
      %1200 = dma.smem_to_hbm [#allocation28], 16, %s12, [#allocation20]
    $region85: #{tpu_custom_call.1} parent=1 // pred_fallthru
      _
    // Predicated region
    $region86: #{tpu_custom_call.1} parent=1 // pred_check
      _
    $region87: #{tpu_custom_call.1} parent=1 // pred_check_branch
      %1202 = sbr.rel (0) target = $region89
    $region88: #{tpu_custom_call.1} parent=1 // pred_region
      %1203 = dma.done [#allocation20], 16
    $region89: #{tpu_custom_call.1} parent=1 // pred_fallthru
      _
    %1204 = sfence
    %1205 = vsyncpa [#allocation18], 1
    %1206 = vsyncpa [#allocation23], 1
    %1207 = vsyncpa [#allocation26], 1
    %1208 = vsyncpa [#allocation19], 1
    %1209 = vsyncpa [#allocation20], 1

</llo_original>
